<compile_context>
chip_gen: v6e
topology: v6e:2x2x1
jax: 0.10.0
libtpu: 0.0.40
codegen_flags: <defaults>
</compile_context>

<pallas_src>
import functools

import jax
import jax.numpy as jnp
from jax.experimental import pallas as pl
from jax.experimental.pallas import tpu as pltpu


def _round_up(x, m):
    return ((x + m - 1) // m) * m


def _rnn_block_kernel(x_ref, h0_ref, wx_ref, wh_ref, b_ref,
                      out_ref, hlast_ref, xproj_scr,
                      *, tb, batch, hp, seq_len):
    blk = pl.program_id(0)

    # Seed the hidden carry on the first grid step.  hlast_ref has a constant
    # index_map, so its VMEM buffer is resident across all grid steps and
    # doubles as the cross-block carry (no scratch, HBM writeback only once
    # at the very end).
    @pl.when(blk == 0)
    def _():
        hlast_ref[...] = h0_ref[...]

    # Block-level input projection: one (TB*B, IP) @ (IP, NP) MXU pass for all
    # TB steps, with the fused bias folded in.  Padded logit lanes of the bias
    # hold -1e30, implementing the output-lane mask at zero per-step cost.
    x_flat = x_ref[...].reshape(tb * batch, -1)
    xproj = jnp.dot(x_flat, wx_ref[...], preferred_element_type=jnp.float32)
    xproj_scr[...] = (xproj + b_ref[...]).reshape(tb, batch, -1)

    ragged = (seq_len % tb) != 0

    def step(t, h):
        # Serial path: one K=128 MXU pass (h @ W_h -> [hidden | logits])
        # plus a vector add of the precomputed input projection.
        res = jnp.dot(h, wh_ref[...], preferred_element_type=jnp.float32)
        res = res + xproj_scr[t]
        hid = res[:, 0:hp]
        logits = res[:, hp:]

        # Numerically stable log-softmax.  Padded logit lanes sit at ~-1e30
        # (bias mask, zero weight columns) so they neither win the max nor
        # contribute to the exp-sum.
        m = jnp.max(logits, axis=1, keepdims=True)
        shifted = logits - m
        lse = jnp.log(jnp.sum(jnp.exp(shifted), axis=1, keepdims=True))
        out_ref[t] = shifted - lse

        if ragged:
            # Ragged tail: freeze the hidden state for padded time steps.
            valid = (blk * tb + t) < seq_len
            hid = jnp.where(valid, hid, h)
        return hid

    # Unrolled inner loop: the hidden carry stays in vregs; softmax/store of
    # step t can overlap the recurrent matmul of step t+1.
    h_out = jax.lax.fori_loop(0, tb, step, hlast_ref[...], unroll=True)
    hlast_ref[...] = h_out


def prep_rnn_params(w_i2h, b_i2h, w_i2o, b_i2o, input_size):
    """One-time (hoisted) prep: transpose, split, fuse and lane-pad.

    PyTorch Linear weights are (out, in).  Produces:
      w_x: (IP, HP+OP)  padded-input rows -> [hidden | logits] columns
      w_h: (HP, HP+OP)  hidden rows       -> [hidden | logits] columns
      b  : (1,  HP+OP)  fused bias; padded logit lanes hold -1e30 (mask).
    """
    H = w_i2h.shape[0]
    O = w_i2o.shape[0]
    I = input_size
    IP = _round_up(I, 128)
    HP = _round_up(H, 128)
    OP = _round_up(O, 128)
    NP = HP + OP

    wt_h = w_i2h.T.astype(jnp.float32)   # (I+H, H)
    wt_o = w_i2o.T.astype(jnp.float32)   # (I+H, O)

    w_x = jnp.zeros((IP, NP), jnp.float32)
    w_x = w_x.at[0:I, 0:H].set(wt_h[0:I])            # input  -> hidden
    w_x = w_x.at[0:I, HP:HP + O].set(wt_o[0:I])      # input  -> output

    w_h = jnp.zeros((HP, NP), jnp.float32)
    w_h = w_h.at[0:H, 0:H].set(wt_h[I:I + H])        # hidden -> hidden
    w_h = w_h.at[0:H, HP:HP + O].set(wt_o[I:I + H])  # hidden -> output

    b = jnp.zeros((1, NP), jnp.float32)
    b = b.at[0, 0:H].set(b_i2h.astype(jnp.float32))
    b = b.at[0, HP:HP + O].set(b_i2o.astype(jnp.float32))
    b = b.at[0, HP + O:NP].set(-1e30)   # output-lane mask baked into the bias

    dims = dict(I=I, H=H, O=O, IP=IP, HP=HP, OP=OP, NP=NP)
    return w_x, w_h, b, dims


def rnn_sequence_forward(xs, h0, w_x, w_h, b, dims, block_steps=8):
    """Run the whole recurrence in one pallas_call.

    xs: (T, B, I), h0: (B, H).  Returns (log-probs (T, B, O), final hidden (B, H)).
    """
    T, B, I = xs.shape
    H, O = dims["H"], dims["O"]
    IP, HP, OP, NP = dims["IP"], dims["HP"], dims["OP"], dims["NP"]

    TB = max(1, min(block_steps, T))
    num_blocks = pl.cdiv(T, TB)
    T_pad = num_blocks * TB

    # Lane / time padding, once, outside the per-step path.
    xs_p = jnp.zeros((T_pad, B, IP), jnp.float32).at[:T, :, :I].set(
        xs.astype(jnp.float32))
    h0_p = jnp.zeros((B, HP), jnp.float32).at[:, :H].set(h0.astype(jnp.float32))

    kernel = functools.partial(_rnn_block_kernel,
                               tb=TB, batch=B, hp=HP, seq_len=T)

    out_full, h_last_p = pl.pallas_call(
        kernel,
        out_shape=(
            jax.ShapeDtypeStruct((T_pad, B, OP), jnp.float32),  # per-step log-probs
            jax.ShapeDtypeStruct((B, HP), jnp.float32),         # final hidden
        ),
        grid_spec=pltpu.PrefetchScalarGridSpec(
            num_scalar_prefetch=0,
            grid=(num_blocks,),
            in_specs=[
                pl.BlockSpec((TB, B, IP), lambda blk: (blk, 0, 0)),  # x, streamed per block
                pl.BlockSpec((B, HP), lambda blk: (0, 0)),           # h0, fetched once
                pl.BlockSpec((IP, NP), lambda blk: (0, 0)),          # W_x, VMEM-resident
                pl.BlockSpec((HP, NP), lambda blk: (0, 0)),          # W_h, VMEM-resident
                pl.BlockSpec((1, NP), lambda blk: (0, 0)),           # fused bias (+mask)
            ],
            out_specs=(
                pl.BlockSpec((TB, B, OP), lambda blk: (blk, 0, 0)),  # lane-dense outputs
                pl.BlockSpec((B, HP), lambda blk: (0, 0)),           # resident hidden carry
            ),
            scratch_shapes=[
                pltpu.VMEM((TB, B, NP), jnp.float32),   # per-block input projection
            ],
        ),
        compiler_params=pltpu.CompilerParams(
            dimension_semantics=("arbitrary",),   # the recurrence is sequential
        ),
    )(xs_p, h0_p, w_x, w_h, b)

    return out_full[:T, :, :O], h_last_p[:, :H]


def rnn_forward(x, h, w_x, w_h, b, dims):
    """Single-step forward, identical to the PyTorch module's forward."""
    out, h_new = rnn_sequence_forward(x[None], h, w_x, w_h, b, dims, block_steps=1)
    return out[0], h_new


def reference_sequence(xs, h0, w_i2h, b_i2h, w_i2o, b_i2o):
    def step(h, x):
        comb = jnp.concatenate([x, h], axis=1)
        h_new = comb @ w_i2h.T + b_i2h
        out = jax.nn.log_softmax(comb @ w_i2o.T + b_i2o, axis=1)
        return h_new, out
    h_last, outs = jax.lax.scan(step, h0, xs)
    return outs, h_last


if __name__ == "__main__":
    # Shapes consistent with the tutorial module: n_hidden=128, 57-letter
    # one-hot inputs, 18 categories.  Batch of 8 "names", 12 characters long
    # (12 % TB=8 != 0, so the ragged-tail path is exercised too).
    input_size, hidden_size, output_size = 57, 128, 18
    batch, seq_len = 8, 12

    key = jax.random.PRNGKey(0)
    k1, k2, k3, k4, k5 = jax.random.split(key, 5)

    fan_in = input_size + hidden_size
    bound = 1.0 / (fan_in ** 0.5)
    w_i2h = jax.random.uniform(k1, (hidden_size, fan_in), jnp.float32, -bound, bound)
    b_i2h = jax.random.uniform(k2, (hidden_size,), jnp.float32, -bound, bound)
    w_i2o = jax.random.uniform(k3, (output_size, fan_in), jnp.float32, -bound, bound)
    b_i2o = jax.random.uniform(k4, (output_size,), jnp.float32, -bound, bound)

    # One-hot "character" inputs, like lineToTensor.
    letters = jax.random.randint(k5, (seq_len, batch), 0, input_size)
    xs = jax.nn.one_hot(letters, input_size, dtype=jnp.float32)   # (T, B, I)
    h0 = jnp.zeros((batch, hidden_size), jnp.float32)

    # Hoisted once: transpose / split / fuse / pad the Linear parameters.
    w_x, w_h, b, dims = prep_rnn_params(w_i2h, b_i2h, w_i2o, b_i2o, input_size)

    outs, h_last = rnn_sequence_forward(xs, h0, w_x, w_h, b, dims, block_steps=8)
    outs = jax.block_until_ready(outs)
    h_last = jax.block_until_ready(h_last)

    ref_outs, ref_h = reference_sequence(xs, h0, w_i2h, b_i2h, w_i2o, b_i2o)
    assert jnp.allclose(outs, ref_outs, atol=1e-4, rtol=1e-4), "log_softmax mismatch"
    assert jnp.allclose(h_last, ref_h, atol=1e-4, rtol=1e-4), "hidden mismatch"

    # Single step matches the original module's forward exactly.
    out1, h1 = rnn_forward(xs[0], h0, w_x, w_h, b, dims)
    comb0 = jnp.concatenate([xs[0], h0], axis=1)
    ref_out1 = jax.nn.log_softmax(comb0 @ w_i2o.T + b_i2o, axis=1)
    ref_h1 = comb0 @ w_i2h.T + b_i2h
    assert jnp.allclose(out1, ref_out1, atol=1e-5, rtol=1e-5)
    assert jnp.allclose(h1, ref_h1, atol=1e-5, rtol=1e-5)

    print("KERNEL_OK")
</pallas_src>

<mosaic_0001>
module attributes {stable_mosaic.version = 11 : i64} {
  func.func @_rnn_block_kernel(%arg0: i32, %arg1: memref<8x8x128xf32, #tpu.memory_space<vmem>>, %arg2: memref<8x128xf32, #tpu.memory_space<vmem>>, %arg3: memref<128x256xf32, #tpu.memory_space<vmem>>, %arg4: memref<128x256xf32, #tpu.memory_space<vmem>>, %arg5: memref<1x256xf32, #tpu.memory_space<vmem>>, %arg6: memref<8x8x128xf32, #tpu.memory_space<vmem>>, %arg7: memref<8x128xf32, #tpu.memory_space<vmem>>, %arg8: memref<8x8x256xf32, #tpu.memory_space<vmem>>) attributes {dimension_semantics = [#tpu.dimension_semantics<arbitrary>], iteration_bounds = array<i64: 2>, scalar_prefetch = 0 : i64, scratch_operands = 1 : i64, tpu.core_type = #tpu.core_type<tc>, window_params = [{transform_indices = @transform_0, window_bounds = array<i64: 8, 8, 128>}, {pipeline_mode = #tpu.pipeline_mode<synchronous>, transform_indices = @transform_1, window_bounds = array<i64: 8, 128>}, {pipeline_mode = #tpu.pipeline_mode<synchronous>, transform_indices = @transform_2, window_bounds = array<i64: 128, 256>}, {pipeline_mode = #tpu.pipeline_mode<synchronous>, transform_indices = @transform_3, window_bounds = array<i64: 128, 256>}, {pipeline_mode = #tpu.pipeline_mode<synchronous>, transform_indices = @transform_4, window_bounds = array<i64: 1, 256>}, {transform_indices = @transform_5, window_bounds = array<i64: 8, 8, 128>}, {pipeline_mode = #tpu.pipeline_mode<synchronous>, transform_indices = @transform_6, window_bounds = array<i64: 8, 128>}]} {
    %c0_i32 = arith.constant 0 : i32
    %0 = arith.cmpi eq, %arg0, %c0_i32 : i32
    %1 = arith.extui %0 : i1 to i32
    %c0_i32_0 = arith.constant 0 : i32
    %2 = arith.cmpi ne, %1, %c0_i32_0 : i32
    scf.if %2 {
      %c0_102 = arith.constant 0 : index
      %c0_103 = arith.constant 0 : index
      %222 = vector.load %arg2[%c0_102, %c0_103] : memref<8x128xf32, #tpu.memory_space<vmem>>, vector<8x128xf32>
      %c0_104 = arith.constant 0 : index
      %c0_105 = arith.constant 0 : index
      %223 = vector.load %arg7[%c0_104, %c0_105] : memref<8x128xf32, #tpu.memory_space<vmem>>, vector<8x128xf32>
      tpu.vector_store %arg7[%c0_104, %c0_105], %222 {strides = array<i32>} : memref<8x128xf32, #tpu.memory_space<vmem>>, vector<8x128xf32>,
    } else {
    }
    %c0 = arith.constant 0 : index
    %c0_1 = arith.constant 0 : index
    %c0_2 = arith.constant 0 : index
    %3 = vector.load %arg1[%c0, %c0_1, %c0_2] : memref<8x8x128xf32, #tpu.memory_space<vmem>>, vector<8x8x128xf32>
    %4 = vector.shape_cast %3 : vector<8x8x128xf32> to vector<64x128xf32>
    %c0_3 = arith.constant 0 : index
    %c0_4 = arith.constant 0 : index
    %5 = vector.load %arg3[%c0_3, %c0_4] : memref<128x256xf32, #tpu.memory_space<vmem>>, vector<128x256xf32>
    %cst = arith.constant dense<0.000000e+00> : vector<64x256xf32>
    %6 = tpu.matmul %4, %5, %cst {dimension_numbers = #tpu.dot_dimension_numbers<[1], [0], [0], [1], [0, 0, 1, 1], [], []>} : vector<64x128xf32>, vector<128x256xf32>, vector<64x256xf32> -> vector<64x256xf32>
    %c0_5 = arith.constant 0 : index
    %c0_6 = arith.constant 0 : index
    %7 = vector.load %arg5[%c0_5, %c0_6] : memref<1x256xf32, #tpu.memory_space<vmem>>, vector<1x256xf32>
    %8 = vector.broadcast %7 : vector<1x256xf32> to vector<64x256xf32>
    %9 = arith.addf %6, %8 : vector<64x256xf32>
    %10 = vector.shape_cast %9 : vector<64x256xf32> to vector<8x8x256xf32>
    %c0_7 = arith.constant 0 : index
    %c0_8 = arith.constant 0 : index
    %c0_9 = arith.constant 0 : index
    %11 = vector.load %arg8[%c0_7, %c0_8, %c0_9] : memref<8x8x256xf32, #tpu.memory_space<vmem>>, vector<8x8x256xf32>
    tpu.vector_store %arg8[%c0_7, %c0_8, %c0_9], %10 {strides = array<i32>} : memref<8x8x256xf32, #tpu.memory_space<vmem>>, vector<8x8x256xf32>,
    %c0_10 = arith.constant 0 : index
    %c0_11 = arith.constant 0 : index
    %12 = vector.load %arg7[%c0_10, %c0_11] : memref<8x128xf32, #tpu.memory_space<vmem>>, vector<8x128xf32>
    %c0_i32_12 = arith.constant 0 : i32
    %c0_13 = arith.constant 0 : index
    %c0_14 = arith.constant 0 : index
    %13 = vector.load %arg4[%c0_13, %c0_14] : memref<128x256xf32, #tpu.memory_space<vmem>>, vector<128x256xf32>
    %cst_15 = arith.constant dense<0.000000e+00> : vector<8x256xf32>
    %14 = tpu.matmul %12, %13, %cst_15 {dimension_numbers = #tpu.dot_dimension_numbers<[1], [0], [0], [1], [0, 0, 1, 1], [], []>} : vector<8x128xf32>, vector<128x256xf32>, vector<8x256xf32> -> vector<8x256xf32>
    %15 = arith.index_cast %c0_i32_12 : i32 to index
    %c0_16 = arith.constant 0 : index
    %c0_17 = arith.constant 0 : index
    %16 = vector.load %arg8[%15, %c0_16, %c0_17] : memref<8x8x256xf32, #tpu.memory_space<vmem>>, vector<1x8x256xf32>
    %17 = vector.shape_cast %16 : vector<1x8x256xf32> to vector<8x256xf32>
    %18 = arith.addf %14, %17 : vector<8x256xf32>
    %19 = vector.extract_strided_slice %18 {offsets = [0, 0], sizes = [8, 128], strides = [1, 1]} : vector<8x256xf32> to vector<8x128xf32>
    %20 = vector.extract_strided_slice %18 {offsets = [0, 128], sizes = [8, 128], strides = [1, 1]} : vector<8x256xf32> to vector<8x128xf32>
    %cst_18 = arith.constant dense<0xFF800000> : vector<8xf32>
    %21 = vector.multi_reduction <maximumf>, %20, %cst_18 [1] : vector<8x128xf32> to vector<8xf32>
    %22 = vector.shape_cast %21 : vector<8xf32> to vector<8x1xf32>
    %23 = vector.broadcast %22 : vector<8x1xf32> to vector<8x128xf32>
    %24 = arith.subf %20, %23 : vector<8x128xf32>
    %25 = math.exp %24 : vector<8x128xf32>
    %cst_19 = arith.constant dense<0.000000e+00> : vector<8xf32>
    %26 = vector.multi_reduction <add>, %25, %cst_19 [1] : vector<8x128xf32> to vector<8xf32>
    %27 = vector.shape_cast %26 : vector<8xf32> to vector<8x1xf32>
    %28 = math.log %27 : vector<8x1xf32>
    %29 = vector.broadcast %28 : vector<8x1xf32> to vector<8x128xf32>
    %30 = arith.subf %24, %29 : vector<8x128xf32>
    %31 = arith.index_cast %c0_i32_12 : i32 to index
    %c0_20 = arith.constant 0 : index
    %c0_21 = arith.constant 0 : index
    %32 = vector.load %arg6[%31, %c0_20, %c0_21] : memref<8x8x128xf32, #tpu.memory_space<vmem>>, vector<1x8x128xf32>
    %33 = vector.shape_cast %32 : vector<1x8x128xf32> to vector<8x128xf32>
    %34 = vector.shape_cast %30 : vector<8x128xf32> to vector<1x8x128xf32>
    tpu.vector_store %arg6[%31, %c0_20, %c0_21], %34 {strides = array<i32>} : memref<8x8x128xf32, #tpu.memory_space<vmem>>, vector<1x8x128xf32>,
    %c8_i32 = arith.constant 8 : i32
    %35 = arith.muli %arg0, %c8_i32 : i32
    %36 = arith.addi %35, %c0_i32_12 : i32
    %c12_i32 = arith.constant 12 : i32
    %37 = arith.cmpi slt, %36, %c12_i32 : i32
    %38 = arith.select %37, %19, %12 : vector<8x128xf32>
    %c1_i32 = arith.constant 1 : i32
    %c0_22 = arith.constant 0 : index
    %c0_23 = arith.constant 0 : index
    %39 = vector.load %arg4[%c0_22, %c0_23] : memref<128x256xf32, #tpu.memory_space<vmem>>, vector<128x256xf32>
    %cst_24 = arith.constant dense<0.000000e+00> : vector<8x256xf32>
    %40 = tpu.matmul %38, %39, %cst_24 {dimension_numbers = #tpu.dot_dimension_numbers<[1], [0], [0], [1], [0, 0, 1, 1], [], []>} : vector<8x128xf32>, vector<128x256xf32>, vector<8x256xf32> -> vector<8x256xf32>
    %41 = arith.index_cast %c1_i32 : i32 to index
    %c0_25 = arith.constant 0 : index
    %c0_26 = arith.constant 0 : index
    %42 = vector.load %arg8[%41, %c0_25, %c0_26] : memref<8x8x256xf32, #tpu.memory_space<vmem>>, vector<1x8x256xf32>
    %43 = vector.shape_cast %42 : vector<1x8x256xf32> to vector<8x256xf32>
    %44 = arith.addf %40, %43 : vector<8x256xf32>
    %45 = vector.extract_strided_slice %44 {offsets = [0, 0], sizes = [8, 128], strides = [1, 1]} : vector<8x256xf32> to vector<8x128xf32>
    %46 = vector.extract_strided_slice %44 {offsets = [0, 128], sizes = [8, 128], strides = [1, 1]} : vector<8x256xf32> to vector<8x128xf32>
    %cst_27 = arith.constant dense<0xFF800000> : vector<8xf32>
    %47 = vector.multi_reduction <maximumf>, %46, %cst_27 [1] : vector<8x128xf32> to vector<8xf32>
    %48 = vector.shape_cast %47 : vector<8xf32> to vector<8x1xf32>
    %49 = vector.broadcast %48 : vector<8x1xf32> to vector<8x128xf32>
    %50 = arith.subf %46, %49 : vector<8x128xf32>
    %51 = math.exp %50 : vector<8x128xf32>
    %cst_28 = arith.constant dense<0.000000e+00> : vector<8xf32>
    %52 = vector.multi_reduction <add>, %51, %cst_28 [1] : vector<8x128xf32> to vector<8xf32>
    %53 = vector.shape_cast %52 : vector<8xf32> to vector<8x1xf32>
    %54 = math.log %53 : vector<8x1xf32>
    %55 = vector.broadcast %54 : vector<8x1xf32> to vector<8x128xf32>
    %56 = arith.subf %50, %55 : vector<8x128xf32>
    %57 = arith.index_cast %c1_i32 : i32 to index
    %c0_29 = arith.constant 0 : index
    %c0_30 = arith.constant 0 : index
    %58 = vector.load %arg6[%57, %c0_29, %c0_30] : memref<8x8x128xf32, #tpu.memory_space<vmem>>, vector<1x8x128xf32>
    %59 = vector.shape_cast %58 : vector<1x8x128xf32> to vector<8x128xf32>
    %60 = vector.shape_cast %56 : vector<8x128xf32> to vector<1x8x128xf32>
    tpu.vector_store %arg6[%57, %c0_29, %c0_30], %60 {strides = array<i32>} : memref<8x8x128xf32, #tpu.memory_space<vmem>>, vector<1x8x128xf32>,
    %c8_i32_31 = arith.constant 8 : i32
    %61 = arith.muli %arg0, %c8_i32_31 : i32
    %62 = arith.addi %61, %c1_i32 : i32
    %c12_i32_32 = arith.constant 12 : i32
    %63 = arith.cmpi slt, %62, %c12_i32_32 : i32
    %64 = arith.select %63, %45, %38 : vector<8x128xf32>
    %c2_i32 = arith.constant 2 : i32
    %c0_33 = arith.constant 0 : index
    %c0_34 = arith.constant 0 : index
    %65 = vector.load %arg4[%c0_33, %c0_34] : memref<128x256xf32, #tpu.memory_space<vmem>>, vector<128x256xf32>
    %cst_35 = arith.constant dense<0.000000e+00> : vector<8x256xf32>
    %66 = tpu.matmul %64, %65, %cst_35 {dimension_numbers = #tpu.dot_dimension_numbers<[1], [0], [0], [1], [0, 0, 1, 1], [], []>} : vector<8x128xf32>, vector<128x256xf32>, vector<8x256xf32> -> vector<8x256xf32>
    %67 = arith.index_cast %c2_i32 : i32 to index
    %c0_36 = arith.constant 0 : index
    %c0_37 = arith.constant 0 : index
    %68 = vector.load %arg8[%67, %c0_36, %c0_37] : memref<8x8x256xf32, #tpu.memory_space<vmem>>, vector<1x8x256xf32>
    %69 = vector.shape_cast %68 : vector<1x8x256xf32> to vector<8x256xf32>
    %70 = arith.addf %66, %69 : vector<8x256xf32>
    %71 = vector.extract_strided_slice %70 {offsets = [0, 0], sizes = [8, 128], strides = [1, 1]} : vector<8x256xf32> to vector<8x128xf32>
    %72 = vector.extract_strided_slice %70 {offsets = [0, 128], sizes = [8, 128], strides = [1, 1]} : vector<8x256xf32> to vector<8x128xf32>
    %cst_38 = arith.constant dense<0xFF800000> : vector<8xf32>
    %73 = vector.multi_reduction <maximumf>, %72, %cst_38 [1] : vector<8x128xf32> to vector<8xf32>
    %74 = vector.shape_cast %73 : vector<8xf32> to vector<8x1xf32>
    %75 = vector.broadcast %74 : vector<8x1xf32> to vector<8x128xf32>
    %76 = arith.subf %72, %75 : vector<8x128xf32>
    %77 = math.exp %76 : vector<8x128xf32>
    %cst_39 = arith.constant dense<0.000000e+00> : vector<8xf32>
    %78 = vector.multi_reduction <add>, %77, %cst_39 [1] : vector<8x128xf32> to vector<8xf32>
    %79 = vector.shape_cast %78 : vector<8xf32> to vector<8x1xf32>
    %80 = math.log %79 : vector<8x1xf32>
    %81 = vector.broadcast %80 : vector<8x1xf32> to vector<8x128xf32>
    %82 = arith.subf %76, %81 : vector<8x128xf32>
    %83 = arith.index_cast %c2_i32 : i32 to index
    %c0_40 = arith.constant 0 : index
    %c0_41 = arith.constant 0 : index
    %84 = vector.load %arg6[%83, %c0_40, %c0_41] : memref<8x8x128xf32, #tpu.memory_space<vmem>>, vector<1x8x128xf32>
    %85 = vector.shape_cast %84 : vector<1x8x128xf32> to vector<8x128xf32>
    %86 = vector.shape_cast %82 : vector<8x128xf32> to vector<1x8x128xf32>
    tpu.vector_store %arg6[%83, %c0_40, %c0_41], %86 {strides = array<i32>} : memref<8x8x128xf32, #tpu.memory_space<vmem>>, vector<1x8x128xf32>,
    %c8_i32_42 = arith.constant 8 : i32
    %87 = arith.muli %arg0, %c8_i32_42 : i32
    %88 = arith.addi %87, %c2_i32 : i32
    %c12_i32_43 = arith.constant 12 : i32
    %89 = arith.cmpi slt, %88, %c12_i32_43 : i32
    %90 = arith.select %89, %71, %64 : vector<8x128xf32>
    %c3_i32 = arith.constant 3 : i32
    %c0_44 = arith.constant 0 : index
    %c0_45 = arith.constant 0 : index
    %91 = vector.load %arg4[%c0_44, %c0_45] : memref<128x256xf32, #tpu.memory_space<vmem>>, vector<128x256xf32>
    %cst_46 = arith.constant dense<0.000000e+00> : vector<8x256xf32>
    %92 = tpu.matmul %90, %91, %cst_46 {dimension_numbers = #tpu.dot_dimension_numbers<[1], [0], [0], [1], [0, 0, 1, 1], [], []>} : vector<8x128xf32>, vector<128x256xf32>, vector<8x256xf32> -> vector<8x256xf32>
    %93 = arith.index_cast %c3_i32 : i32 to index
    %c0_47 = arith.constant 0 : index
    %c0_48 = arith.constant 0 : index
    %94 = vector.load %arg8[%93, %c0_47, %c0_48] : memref<8x8x256xf32, #tpu.memory_space<vmem>>, vector<1x8x256xf32>
    %95 = vector.shape_cast %94 : vector<1x8x256xf32> to vector<8x256xf32>
    %96 = arith.addf %92, %95 : vector<8x256xf32>
    %97 = vector.extract_strided_slice %96 {offsets = [0, 0], sizes = [8, 128], strides = [1, 1]} : vector<8x256xf32> to vector<8x128xf32>
    %98 = vector.extract_strided_slice %96 {offsets = [0, 128], sizes = [8, 128], strides = [1, 1]} : vector<8x256xf32> to vector<8x128xf32>
    %cst_49 = arith.constant dense<0xFF800000> : vector<8xf32>
    %99 = vector.multi_reduction <maximumf>, %98, %cst_49 [1] : vector<8x128xf32> to vector<8xf32>
    %100 = vector.shape_cast %99 : vector<8xf32> to vector<8x1xf32>
    %101 = vector.broadcast %100 : vector<8x1xf32> to vector<8x128xf32>
    %102 = arith.subf %98, %101 : vector<8x128xf32>
    %103 = math.exp %102 : vector<8x128xf32>
    %cst_50 = arith.constant dense<0.000000e+00> : vector<8xf32>
    %104 = vector.multi_reduction <add>, %103, %cst_50 [1] : vector<8x128xf32> to vector<8xf32>
    %105 = vector.shape_cast %104 : vector<8xf32> to vector<8x1xf32>
    %106 = math.log %105 : vector<8x1xf32>
    %107 = vector.broadcast %106 : vector<8x1xf32> to vector<8x128xf32>
    %108 = arith.subf %102, %107 : vector<8x128xf32>
    %109 = arith.index_cast %c3_i32 : i32 to index
    %c0_51 = arith.constant 0 : index
    %c0_52 = arith.constant 0 : index
    %110 = vector.load %arg6[%109, %c0_51, %c0_52] : memref<8x8x128xf32, #tpu.memory_space<vmem>>, vector<1x8x128xf32>
    %111 = vector.shape_cast %110 : vector<1x8x128xf32> to vector<8x128xf32>
    %112 = vector.shape_cast %108 : vector<8x128xf32> to vector<1x8x128xf32>
    tpu.vector_store %arg6[%109, %c0_51, %c0_52], %112 {strides = array<i32>} : memref<8x8x128xf32, #tpu.memory_space<vmem>>, vector<1x8x128xf32>,
    %c8_i32_53 = arith.constant 8 : i32
    %113 = arith.muli %arg0, %c8_i32_53 : i32
    %114 = arith.addi %113, %c3_i32 : i32
    %c12_i32_54 = arith.constant 12 : i32
    %115 = arith.cmpi slt, %114, %c12_i32_54 : i32
    %116 = arith.select %115, %97, %90 : vector<8x128xf32>
    %c4_i32 = arith.constant 4 : i32
    %c0_55 = arith.constant 0 : index
    %c0_56 = arith.constant 0 : index
    %117 = vector.load %arg4[%c0_55, %c0_56] : memref<128x256xf32, #tpu.memory_space<vmem>>, vector<128x256xf32>
    %cst_57 = arith.constant dense<0.000000e+00> : vector<8x256xf32>
    %118 = tpu.matmul %116, %117, %cst_57 {dimension_numbers = #tpu.dot_dimension_numbers<[1], [0], [0], [1], [0, 0, 1, 1], [], []>} : vector<8x128xf32>, vector<128x256xf32>, vector<8x256xf32> -> vector<8x256xf32>
    %119 = arith.index_cast %c4_i32 : i32 to index
    %c0_58 = arith.constant 0 : index
    %c0_59 = arith.constant 0 : index
    %120 = vector.load %arg8[%119, %c0_58, %c0_59] : memref<8x8x256xf32, #tpu.memory_space<vmem>>, vector<1x8x256xf32>
    %121 = vector.shape_cast %120 : vector<1x8x256xf32> to vector<8x256xf32>
    %122 = arith.addf %118, %121 : vector<8x256xf32>
    %123 = vector.extract_strided_slice %122 {offsets = [0, 0], sizes = [8, 128], strides = [1, 1]} : vector<8x256xf32> to vector<8x128xf32>
    %124 = vector.extract_strided_slice %122 {offsets = [0, 128], sizes = [8, 128], strides = [1, 1]} : vector<8x256xf32> to vector<8x128xf32>
    %cst_60 = arith.constant dense<0xFF800000> : vector<8xf32>
    %125 = vector.multi_reduction <maximumf>, %124, %cst_60 [1] : vector<8x128xf32> to vector<8xf32>
    %126 = vector.shape_cast %125 : vector<8xf32> to vector<8x1xf32>
    %127 = vector.broadcast %126 : vector<8x1xf32> to vector<8x128xf32>
    %128 = arith.subf %124, %127 : vector<8x128xf32>
    %129 = math.exp %128 : vector<8x128xf32>
    %cst_61 = arith.constant dense<0.000000e+00> : vector<8xf32>
    %130 = vector.multi_reduction <add>, %129, %cst_61 [1] : vector<8x128xf32> to vector<8xf32>
    %131 = vector.shape_cast %130 : vector<8xf32> to vector<8x1xf32>
    %132 = math.log %131 : vector<8x1xf32>
    %133 = vector.broadcast %132 : vector<8x1xf32> to vector<8x128xf32>
    %134 = arith.subf %128, %133 : vector<8x128xf32>
    %135 = arith.index_cast %c4_i32 : i32 to index
    %c0_62 = arith.constant 0 : index
    %c0_63 = arith.constant 0 : index
    %136 = vector.load %arg6[%135, %c0_62, %c0_63] : memref<8x8x128xf32, #tpu.memory_space<vmem>>, vector<1x8x128xf32>
    %137 = vector.shape_cast %136 : vector<1x8x128xf32> to vector<8x128xf32>
    %138 = vector.shape_cast %134 : vector<8x128xf32> to vector<1x8x128xf32>
    tpu.vector_store %arg6[%135, %c0_62, %c0_63], %138 {strides = array<i32>} : memref<8x8x128xf32, #tpu.memory_space<vmem>>, vector<1x8x128xf32>,
    %c8_i32_64 = arith.constant 8 : i32
    %139 = arith.muli %arg0, %c8_i32_64 : i32
    %140 = arith.addi %139, %c4_i32 : i32
    %c12_i32_65 = arith.constant 12 : i32
    %141 = arith.cmpi slt, %140, %c12_i32_65 : i32
    %142 = arith.select %141, %123, %116 : vector<8x128xf32>
    %c5_i32 = arith.constant 5 : i32
    %c0_66 = arith.constant 0 : index
    %c0_67 = arith.constant 0 : index
    %143 = vector.load %arg4[%c0_66, %c0_67] : memref<128x256xf32, #tpu.memory_space<vmem>>, vector<128x256xf32>
    %cst_68 = arith.constant dense<0.000000e+00> : vector<8x256xf32>
    %144 = tpu.matmul %142, %143, %cst_68 {dimension_numbers = #tpu.dot_dimension_numbers<[1], [0], [0], [1], [0, 0, 1, 1], [], []>} : vector<8x128xf32>, vector<128x256xf32>, vector<8x256xf32> -> vector<8x256xf32>
    %145 = arith.index_cast %c5_i32 : i32 to index
    %c0_69 = arith.constant 0 : index
    %c0_70 = arith.constant 0 : index
    %146 = vector.load %arg8[%145, %c0_69, %c0_70] : memref<8x8x256xf32, #tpu.memory_space<vmem>>, vector<1x8x256xf32>
    %147 = vector.shape_cast %146 : vector<1x8x256xf32> to vector<8x256xf32>
    %148 = arith.addf %144, %147 : vector<8x256xf32>
    %149 = vector.extract_strided_slice %148 {offsets = [0, 0], sizes = [8, 128], strides = [1, 1]} : vector<8x256xf32> to vector<8x128xf32>
    %150 = vector.extract_strided_slice %148 {offsets = [0, 128], sizes = [8, 128], strides = [1, 1]} : vector<8x256xf32> to vector<8x128xf32>
    %cst_71 = arith.constant dense<0xFF800000> : vector<8xf32>
    %151 = vector.multi_reduction <maximumf>, %150, %cst_71 [1] : vector<8x128xf32> to vector<8xf32>
    %152 = vector.shape_cast %151 : vector<8xf32> to vector<8x1xf32>
    %153 = vector.broadcast %152 : vector<8x1xf32> to vector<8x128xf32>
    %154 = arith.subf %150, %153 : vector<8x128xf32>
    %155 = math.exp %154 : vector<8x128xf32>
    %cst_72 = arith.constant dense<0.000000e+00> : vector<8xf32>
    %156 = vector.multi_reduction <add>, %155, %cst_72 [1] : vector<8x128xf32> to vector<8xf32>
    %157 = vector.shape_cast %156 : vector<8xf32> to vector<8x1xf32>
    %158 = math.log %157 : vector<8x1xf32>
    %159 = vector.broadcast %158 : vector<8x1xf32> to vector<8x128xf32>
    %160 = arith.subf %154, %159 : vector<8x128xf32>
    %161 = arith.index_cast %c5_i32 : i32 to index
    %c0_73 = arith.constant 0 : index
    %c0_74 = arith.constant 0 : index
    %162 = vector.load %arg6[%161, %c0_73, %c0_74] : memref<8x8x128xf32, #tpu.memory_space<vmem>>, vector<1x8x128xf32>
    %163 = vector.shape_cast %162 : vector<1x8x128xf32> to vector<8x128xf32>
    %164 = vector.shape_cast %160 : vector<8x128xf32> to vector<1x8x128xf32>
    tpu.vector_store %arg6[%161, %c0_73, %c0_74], %164 {strides = array<i32>} : memref<8x8x128xf32, #tpu.memory_space<vmem>>, vector<1x8x128xf32>,
    %c8_i32_75 = arith.constant 8 : i32
    %165 = arith.muli %arg0, %c8_i32_75 : i32
    %166 = arith.addi %165, %c5_i32 : i32
    %c12_i32_76 = arith.constant 12 : i32
    %167 = arith.cmpi slt, %166, %c12_i32_76 : i32
    %168 = arith.select %167, %149, %142 : vector<8x128xf32>
    %c6_i32 = arith.constant 6 : i32
    %c0_77 = arith.constant 0 : index
    %c0_78 = arith.constant 0 : index
    %169 = vector.load %arg4[%c0_77, %c0_78] : memref<128x256xf32, #tpu.memory_space<vmem>>, vector<128x256xf32>
    %cst_79 = arith.constant dense<0.000000e+00> : vector<8x256xf32>
    %170 = tpu.matmul %168, %169, %cst_79 {dimension_numbers = #tpu.dot_dimension_numbers<[1], [0], [0], [1], [0, 0, 1, 1], [], []>} : vector<8x128xf32>, vector<128x256xf32>, vector<8x256xf32> -> vector<8x256xf32>
    %171 = arith.index_cast %c6_i32 : i32 to index
    %c0_80 = arith.constant 0 : index
    %c0_81 = arith.constant 0 : index
    %172 = vector.load %arg8[%171, %c0_80, %c0_81] : memref<8x8x256xf32, #tpu.memory_space<vmem>>, vector<1x8x256xf32>
    %173 = vector.shape_cast %172 : vector<1x8x256xf32> to vector<8x256xf32>
    %174 = arith.addf %170, %173 : vector<8x256xf32>
    %175 = vector.extract_strided_slice %174 {offsets = [0, 0], sizes = [8, 128], strides = [1, 1]} : vector<8x256xf32> to vector<8x128xf32>
    %176 = vector.extract_strided_slice %174 {offsets = [0, 128], sizes = [8, 128], strides = [1, 1]} : vector<8x256xf32> to vector<8x128xf32>
    %cst_82 = arith.constant dense<0xFF800000> : vector<8xf32>
    %177 = vector.multi_reduction <maximumf>, %176, %cst_82 [1] : vector<8x128xf32> to vector<8xf32>
    %178 = vector.shape_cast %177 : vector<8xf32> to vector<8x1xf32>
    %179 = vector.broadcast %178 : vector<8x1xf32> to vector<8x128xf32>
    %180 = arith.subf %176, %179 : vector<8x128xf32>
    %181 = math.exp %180 : vector<8x128xf32>
    %cst_83 = arith.constant dense<0.000000e+00> : vector<8xf32>
    %182 = vector.multi_reduction <add>, %181, %cst_83 [1] : vector<8x128xf32> to vector<8xf32>
    %183 = vector.shape_cast %182 : vector<8xf32> to vector<8x1xf32>
    %184 = math.log %183 : vector<8x1xf32>
    %185 = vector.broadcast %184 : vector<8x1xf32> to vector<8x128xf32>
    %186 = arith.subf %180, %185 : vector<8x128xf32>
    %187 = arith.index_cast %c6_i32 : i32 to index
    %c0_84 = arith.constant 0 : index
    %c0_85 = arith.constant 0 : index
    %188 = vector.load %arg6[%187, %c0_84, %c0_85] : memref<8x8x128xf32, #tpu.memory_space<vmem>>, vector<1x8x128xf32>
    %189 = vector.shape_cast %188 : vector<1x8x128xf32> to vector<8x128xf32>
    %190 = vector.shape_cast %186 : vector<8x128xf32> to vector<1x8x128xf32>
    tpu.vector_store %arg6[%187, %c0_84, %c0_85], %190 {strides = array<i32>} : memref<8x8x128xf32, #tpu.memory_space<vmem>>, vector<1x8x128xf32>,
    %c8_i32_86 = arith.constant 8 : i32
    %191 = arith.muli %arg0, %c8_i32_86 : i32
    %192 = arith.addi %191, %c6_i32 : i32
    %c12_i32_87 = arith.constant 12 : i32
    %193 = arith.cmpi slt, %192, %c12_i32_87 : i32
    %194 = arith.select %193, %175, %168 : vector<8x128xf32>
    %c7_i32 = arith.constant 7 : i32
    %c0_88 = arith.constant 0 : index
    %c0_89 = arith.constant 0 : index
    %195 = vector.load %arg4[%c0_88, %c0_89] : memref<128x256xf32, #tpu.memory_space<vmem>>, vector<128x256xf32>
    %cst_90 = arith.constant dense<0.000000e+00> : vector<8x256xf32>
    %196 = tpu.matmul %194, %195, %cst_90 {dimension_numbers = #tpu.dot_dimension_numbers<[1], [0], [0], [1], [0, 0, 1, 1], [], []>} : vector<8x128xf32>, vector<128x256xf32>, vector<8x256xf32> -> vector<8x256xf32>
    %197 = arith.index_cast %c7_i32 : i32 to index
    %c0_91 = arith.constant 0 : index
    %c0_92 = arith.constant 0 : index
    %198 = vector.load %arg8[%197, %c0_91, %c0_92] : memref<8x8x256xf32, #tpu.memory_space<vmem>>, vector<1x8x256xf32>
    %199 = vector.shape_cast %198 : vector<1x8x256xf32> to vector<8x256xf32>
    %200 = arith.addf %196, %199 : vector<8x256xf32>
    %201 = vector.extract_strided_slice %200 {offsets = [0, 0], sizes = [8, 128], strides = [1, 1]} : vector<8x256xf32> to vector<8x128xf32>
    %202 = vector.extract_strided_slice %200 {offsets = [0, 128], sizes = [8, 128], strides = [1, 1]} : vector<8x256xf32> to vector<8x128xf32>
    %cst_93 = arith.constant dense<0xFF800000> : vector<8xf32>
    %203 = vector.multi_reduction <maximumf>, %202, %cst_93 [1] : vector<8x128xf32> to vector<8xf32>
    %204 = vector.shape_cast %203 : vector<8xf32> to vector<8x1xf32>
    %205 = vector.broadcast %204 : vector<8x1xf32> to vector<8x128xf32>
    %206 = arith.subf %202, %205 : vector<8x128xf32>
    %207 = math.exp %206 : vector<8x128xf32>
    %cst_94 = arith.constant dense<0.000000e+00> : vector<8xf32>
    %208 = vector.multi_reduction <add>, %207, %cst_94 [1] : vector<8x128xf32> to vector<8xf32>
    %209 = vector.shape_cast %208 : vector<8xf32> to vector<8x1xf32>
    %210 = math.log %209 : vector<8x1xf32>
    %211 = vector.broadcast %210 : vector<8x1xf32> to vector<8x128xf32>
    %212 = arith.subf %206, %211 : vector<8x128xf32>
    %213 = arith.index_cast %c7_i32 : i32 to index
    %c0_95 = arith.constant 0 : index
    %c0_96 = arith.constant 0 : index
    %214 = vector.load %arg6[%213, %c0_95, %c0_96] : memref<8x8x128xf32, #tpu.memory_space<vmem>>, vector<1x8x128xf32>
    %215 = vector.shape_cast %214 : vector<1x8x128xf32> to vector<8x128xf32>
    %216 = vector.shape_cast %212 : vector<8x128xf32> to vector<1x8x128xf32>
    tpu.vector_store %arg6[%213, %c0_95, %c0_96], %216 {strides = array<i32>} : memref<8x8x128xf32, #tpu.memory_space<vmem>>, vector<1x8x128xf32>,
    %c8_i32_97 = arith.constant 8 : i32
    %217 = arith.muli %arg0, %c8_i32_97 : i32
    %218 = arith.addi %217, %c7_i32 : i32
    %c12_i32_98 = arith.constant 12 : i32
    %219 = arith.cmpi slt, %218, %c12_i32_98 : i32
    %220 = arith.select %219, %201, %194 : vector<8x128xf32>
    %c8_i32_99 = arith.constant 8 : i32
    %c0_100 = arith.constant 0 : index
    %c0_101 = arith.constant 0 : index
    %221 = vector.load %arg7[%c0_100, %c0_101] : memref<8x128xf32, #tpu.memory_space<vmem>>, vector<8x128xf32>
    tpu.vector_store %arg7[%c0_100, %c0_101], %220 {strides = array<i32>} : memref<8x128xf32, #tpu.memory_space<vmem>>, vector<8x128xf32>,
    return
  }
  func.func @transform_0(%arg0: i32) -> (i32, i32, i32) {
    %c0_i32 = arith.constant 0 : i32
    %c0_i32_0 = arith.constant 0 : i32
    %c0_i32_1 = arith.constant 0 : i32
    return %arg0, %c0_i32, %c0_i32_0 : i32, i32, i32
  }
  func.func @transform_1(%arg0: i32) -> (i32, i32) {
    %c0_i32 = arith.constant 0 : i32
    %c0_i32_0 = arith.constant 0 : i32
    %c0_i32_1 = arith.constant 0 : i32
    return %c0_i32, %c0_i32_0 : i32, i32
  }
  func.func @transform_2(%arg0: i32) -> (i32, i32) {
    %c0_i32 = arith.constant 0 : i32
    %c0_i32_0 = arith.constant 0 : i32
    %c0_i32_1 = arith.constant 0 : i32
    return %c0_i32, %c0_i32_0 : i32, i32
  }
  func.func @transform_3(%arg0: i32) -> (i32, i32) {
    %c0_i32 = arith.constant 0 : i32
    %c0_i32_0 = arith.constant 0 : i32
    %c0_i32_1 = arith.constant 0 : i32
    return %c0_i32, %c0_i32_0 : i32, i32
  }
  func.func @transform_4(%arg0: i32) -> (i32, i32) {
    %c0_i32 = arith.constant 0 : i32
    %c0_i32_0 = arith.constant 0 : i32
    %c0_i32_1 = arith.constant 0 : i32
    return %c0_i32, %c0_i32_0 : i32, i32
  }
  func.func @transform_5(%arg0: i32) -> (i32, i32, i32) {
    %c0_i32 = arith.constant 0 : i32
    %c0_i32_0 = arith.constant 0 : i32
    %c0_i32_1 = arith.constant 0 : i32
    return %arg0, %c0_i32, %c0_i32_0 : i32, i32, i32
  }
  func.func @transform_6(%arg0: i32) -> (i32, i32) {
    %c0_i32 = arith.constant 0 : i32
    %c0_i32_0 = arith.constant 0 : i32
    %c0_i32_1 = arith.constant 0 : i32
    return %c0_i32, %c0_i32_0 : i32, i32
  }
}

</mosaic_0001>

<llo_original>
// kernel: tpu_custom_call.1
$region0: #{tpu_custom_call.1}
  #allocation0 [shape = 'u32[]', space=smem, size = 0x4, offset = 0x4, fixed_abs, tag = 'smem constant byte address 0x4 - core index']
  #allocation1 [shape = 'u32[144,128]{1,0:T(1,128)}', space=vmem, size = 0x12000, scoped, tag = 'internal scratch']
  #allocation2 [shape = 'f32[8,8,256]{2,1,0:T(8,128)}', space=vmem, size = 0x10000, scoped, tag = 'scratch operand']
  %s0 = inlined_call_operand.hbm [shape: f32[16,8,128], index: 0, kind: input, shape index: {}]
  %s1 = inlined_call_operand.hbm [shape: f32[8,128], index: 1, kind: input, shape index: {}]
  %s2 = inlined_call_operand.hbm [shape: f32[128,256], index: 2, kind: input, shape index: {}]
  %s3 = inlined_call_operand.hbm [shape: f32[128,256], index: 3, kind: input, shape index: {}]
  %s4 = inlined_call_operand.vmem [shape: f32[1,256], index: 4, kind: input, shape index: {}]
  %s5 = inlined_call_operand.hbm [shape: f32[16,8,128], index: 5, kind: output, shape index: {0}]
  %s6 = inlined_call_operand.hbm [shape: f32[8,128], index: 6, kind: output, shape index: {1}]
  %7 = xla_tuple %s5, %s6
  %s8 = sld [smem:[#allocation0]]
  $region81: #{tpu_custom_call.1} parent=0
    _
  %s10 = ssub.s32 1, %s8
  %s11 = scalar_select 0, %s10, %s8
  $region1: #{tpu_custom_call.1} parent=0
    #allocation3 [shape = 'u8[65536]{0}', space=vmem, size = 0x10000, scoped, tag = 'input window, operand 0']
    #allocation4 [shape = 's32[2]{0}', space=sflag, size = 0x8, scoped, tag = 'scoped memory for tpu_custom_call.1']
    #allocation5 [shape = 's32[2]{0}', space=sflag, size = 0x8, scoped, tag = 'scoped memory for tpu_custom_call.1']
    #allocation6 [shape = 'u8[4096]{0}', space=vmem, size = 0x1000, scoped, tag = 'input window, operand 1, single buffered']
    #allocation7 [shape = 's32[1]{0}', space=sflag, size = 0x4, scoped, tag = 'scoped memory for tpu_custom_call.1']
    #allocation8 [shape = 'u8[131072]{0}', space=vmem, size = 0x20000, scoped, tag = 'input window, operand 2, single buffered']
    #allocation9 [shape = 'u8[131072]{0}', space=vmem, size = 0x20000, scoped, tag = 'input window, operand 3, single buffered']
    #allocation10 [shape = 's32[1]{0}', space=sflag, size = 0x4, scoped, tag = 'scoped memory for tpu_custom_call.1']
    #allocation11 [shape = 'u8[65536]{0}', space=vmem, size = 0x10000, scoped, tag = 'output window, operand 0']
    #allocation12 [shape = 'u8[4096]{0}', space=vmem, size = 0x1000, scoped, tag = 'output window, operand 1, single buffered']
    #allocation13 [shape = 's32[1]{0}', space=sflag, size = 0x4, scoped, tag = 'scoped memory for tpu_custom_call.1']
    %12 = vsyncpa [#allocation4], 0
    %s13 = scalar_lea.sflag [#allocation4], 1
    %14 = vsyncpa %s13, 0
    %15 = vsyncpa [#allocation7], 0
    %16 = vsyncpa [#allocation10], 0
    %17 = vsyncpa [#allocation5], 0
    %s18 = scalar_lea.sflag [#allocation5], 1
    %19 = vsyncpa %s18, 0
    %20 = vsyncpa [#allocation13], 0
    loop: start=0, step=1, limit=4
    $region2: #{tpu_custom_call.1} parent=1 // loop_pre_header
      _
    $region3: #{tpu_custom_call.1} parent=1 // loop_header
      %s22 = sphi 0, %s26
      %p23 = scmp.ge.s32.totalorder %s22, 4
      %s32 = sphi 0, %s34
      %s35 = sphi 0, %s32
      %s36 = sphi 0, %s35
      %s52 = sphi 0, %s36
      %s56 = sphi 0, %s56
      %s58 = sphi 0, %s56
      %s59 = sphi 0, %s58
      %s73 = sphi 0, %s59
      %s77 = sphi 0, %s77
      %s79 = sphi 0, %s77
      %s80 = sphi 0, %s79
      %s94 = sphi 0, %s80
      %s98 = sphi 0, %s98
      %s100 = sphi 0, %s98
      %s101 = sphi 0, %s100
      %s115 = sphi 0, %s101
      %s119 = sphi 0, %s119
      %s121 = sphi 0, %s119
      %s122 = sphi 0, %s121
      %s136 = sphi 0, %s122
      %s142 = sphi 0, %s144
      %s145 = sphi 0, %s142
      %s146 = sphi 0, %s145
      %s162 = sphi 0, %s146
      %s166 = sphi 0, %s166
      %s168 = sphi 0, %s166
      %s169 = sphi 0, %s168
      %s183 = sphi 0, %s169
    $region4: #{tpu_custom_call.1} parent=1 // loop_header_branch
      %25 = sbr.rel (%p23) target = $region8
    $region5: #{tpu_custom_call.1} parent=1 // loop_body
      %s27 = ssub.s32 %s22, 1
      %s28 = ssub.s32 %s22, 2
      %s29 = sadd.s32 %s22, 1
      %s30 = ssub.s32 %s22, %s29
      %p31 = scmp.eq.s32.totalorder %s30, 0
      %s33 = sadd.s32 %s32, 1
      %s34 = scalar_select %p31, %s32, %s33
      %p37 = pneg %p31
      %p38 = scmp.eq.s32.totalorder %s22, 1
      %p39 = por %p37, %p38
      %p40 = scmp.ne.s32.totalorder %s32, %s35
      %p41 = scmp.eq.s32.totalorder %s22, 0
      %p42 = por %p40, %p41
      %p43 = scmp.ne.s32.totalorder %s32, %s35
      %p44 = scmp.eq.s32.totalorder %s27, 1
      %p45 = por %p43, %p44
      %p46 = scmp.ne.s32.totalorder %s35, %s36
      %p47 = scmp.eq.s32.totalorder %s27, 0
      %p48 = por %p46, %p47
      %p49 = scmp.ne.s32.totalorder %s35, %s36
      %p50 = scmp.eq.s32.totalorder %s28, 1
      %p51 = por %p49, %p50
      %p53 = scmp.ne.s32.totalorder %s36, %s52
      %p54 = scmp.eq.s32.totalorder %s28, 0
      %p55 = por %p53, %p54
      %s57 = sadd.s32 %s56, 1
      %p60 = scmp.eq.s32.totalorder %s22, 1
      %p61 = scmp.ne.s32.totalorder %s56, %s58
      %p62 = scmp.eq.s32.totalorder %s22, 0
      %p63 = por %p61, %p62
      %p64 = scmp.ne.s32.totalorder %s56, %s58
      %p65 = scmp.eq.s32.totalorder %s27, 1
      %p66 = por %p64, %p65
      %p67 = scmp.ne.s32.totalorder %s58, %s59
      %p68 = scmp.eq.s32.totalorder %s27, 0
      %p69 = por %p67, %p68
      %p70 = scmp.ne.s32.totalorder %s58, %s59
      %p71 = scmp.eq.s32.totalorder %s28, 1
      %p72 = por %p70, %p71
      %p74 = scmp.ne.s32.totalorder %s59, %s73
      %p75 = scmp.eq.s32.totalorder %s28, 0
      %p76 = por %p74, %p75
      %s78 = sadd.s32 %s77, 1
      %p81 = scmp.eq.s32.totalorder %s22, 1
      %p82 = scmp.ne.s32.totalorder %s77, %s79
      %p83 = scmp.eq.s32.totalorder %s22, 0
      %p84 = por %p82, %p83
      %p85 = scmp.ne.s32.totalorder %s77, %s79
      %p86 = scmp.eq.s32.totalorder %s27, 1
      %p87 = por %p85, %p86
      %p88 = scmp.ne.s32.totalorder %s79, %s80
      %p89 = scmp.eq.s32.totalorder %s27, 0
      %p90 = por %p88, %p89
      %p91 = scmp.ne.s32.totalorder %s79, %s80
      %p92 = scmp.eq.s32.totalorder %s28, 1
      %p93 = por %p91, %p92
      %p95 = scmp.ne.s32.totalorder %s80, %s94
      %p96 = scmp.eq.s32.totalorder %s28, 0
      %p97 = por %p95, %p96
      %s99 = sadd.s32 %s98, 1
      %p102 = scmp.eq.s32.totalorder %s22, 1
      %p103 = scmp.ne.s32.totalorder %s98, %s100
      %p104 = scmp.eq.s32.totalorder %s22, 0
      %p105 = por %p103, %p104
      %p106 = scmp.ne.s32.totalorder %s98, %s100
      %p107 = scmp.eq.s32.totalorder %s27, 1
      %p108 = por %p106, %p107
      %p109 = scmp.ne.s32.totalorder %s100, %s101
      %p110 = scmp.eq.s32.totalorder %s27, 0
      %p111 = por %p109, %p110
      %p112 = scmp.ne.s32.totalorder %s100, %s101
      %p113 = scmp.eq.s32.totalorder %s28, 1
      %p114 = por %p112, %p113
      %p116 = scmp.ne.s32.totalorder %s101, %s115
      %p117 = scmp.eq.s32.totalorder %s28, 0
      %p118 = por %p116, %p117
      %s120 = sadd.s32 %s119, 1
      %p123 = scmp.eq.s32.totalorder %s22, 1
      %p124 = scmp.ne.s32.totalorder %s119, %s121
      %p125 = scmp.eq.s32.totalorder %s22, 0
      %p126 = por %p124, %p125
      %p127 = scmp.ne.s32.totalorder %s119, %s121
      %p128 = scmp.eq.s32.totalorder %s27, 1
      %p129 = por %p127, %p128
      %p130 = scmp.ne.s32.totalorder %s121, %s122
      %p131 = scmp.eq.s32.totalorder %s27, 0
      %p132 = por %p130, %p131
      %p133 = scmp.ne.s32.totalorder %s121, %s122
      %p134 = scmp.eq.s32.totalorder %s28, 1
      %p135 = por %p133, %p134
      %p137 = scmp.ne.s32.totalorder %s122, %s136
      %p138 = scmp.eq.s32.totalorder %s28, 0
      %p139 = por %p137, %p138
      %s140 = ssub.s32 %s22, %s29
      %p141 = scmp.eq.s32.totalorder %s140, 0
      %s143 = sadd.s32 %s142, 1
      %s144 = scalar_select %p141, %s142, %s143
      %p147 = pneg %p141
      %p148 = scmp.eq.s32.totalorder %s22, 1
      %p149 = por %p147, %p148
      %p150 = scmp.ne.s32.totalorder %s142, %s145
      %p151 = scmp.eq.s32.totalorder %s22, 0
      %p152 = por %p150, %p151
      %p153 = scmp.ne.s32.totalorder %s142, %s145
      %p154 = scmp.eq.s32.totalorder %s27, 1
      %p155 = por %p153, %p154
      %p156 = scmp.ne.s32.totalorder %s145, %s146
      %p157 = scmp.eq.s32.totalorder %s27, 0
      %p158 = por %p156, %p157
      %p159 = scmp.ne.s32.totalorder %s145, %s146
      %p160 = scmp.eq.s32.totalorder %s28, 1
      %p161 = por %p159, %p160
      %p163 = scmp.ne.s32.totalorder %s146, %s162
      %p164 = scmp.eq.s32.totalorder %s28, 0
      %p165 = por %p163, %p164
      %s167 = sadd.s32 %s166, 1
      %p170 = scmp.eq.s32.totalorder %s22, 1
      %p171 = scmp.ne.s32.totalorder %s166, %s168
      %p172 = scmp.eq.s32.totalorder %s22, 0
      %p173 = por %p171, %p172
      %p174 = scmp.ne.s32.totalorder %s166, %s168
      %p175 = scmp.eq.s32.totalorder %s27, 1
      %p176 = por %p174, %p175
      %p177 = scmp.ne.s32.totalorder %s168, %s169
      %p178 = scmp.eq.s32.totalorder %s27, 0
      %p179 = por %p177, %p178
      %p180 = scmp.ne.s32.totalorder %s168, %s169
      %p181 = scmp.eq.s32.totalorder %s28, 1
      %p182 = por %p180, %p181
      %p184 = scmp.ne.s32.totalorder %s169, %s183
      %p185 = scmp.eq.s32.totalorder %s28, 0
      %p186 = por %p184, %p185
      %p187 = scmp.le.s32.totalorder 1, %s22
      %p188 = scmp.lt.s32.totalorder %s22, 3
      %p189 = pnand %p187, %p188
      %p190 = pneg %p189
      // Predicated region
      $region9: #{tpu_custom_call.1} parent=5 // pred_check
        _
      $region10: #{tpu_custom_call.1} parent=5 // pred_check_branch
        %192 = sbr.rel (%p189) target = $region12
      $region11: #{tpu_custom_call.1} parent=5 // pred_region
        %s193 = ssub.s32 %s22, 1
        // Predicated region
        $region13: #{tpu_custom_call.1} parent=11 // pred_check
          %p194 = pneg %p69
        $region14: #{tpu_custom_call.1} parent=11 // pred_check_branch
          %196 = sbr.rel (%p194) target = $region16
        $region15: #{tpu_custom_call.1} parent=11 // pred_region
          %s198 = ssub.s32 128, 128
          %199 = vsyncadd [#allocation7], %s198
          %s201 = sshll.u32 [#allocation6], 4
          %s202 = int_to_ptr.vmem [resolvable:$true] %s201
          %204 = dma.hbm_to_vmem [thread:$0]  %s1, 128, %s202, [#allocation7]
        $region16: #{tpu_custom_call.1} parent=11 // pred_fallthru
          _
        // Predicated region
        $region17: #{tpu_custom_call.1} parent=11 // pred_check
          %p205 = pneg %p90
        $region18: #{tpu_custom_call.1} parent=11 // pred_check_branch
          %207 = sbr.rel (%p205) target = $region20
        $region19: #{tpu_custom_call.1} parent=11 // pred_region
          %s209 = ssub.s32 4096, 4096
          %210 = vsyncadd [#allocation7], %s209
          %s211 = sshll.u32 [#allocation8], 4
          %s212 = int_to_ptr.vmem [resolvable:$true] %s211
          %217 = dma.hbm_to_vmem [thread:$0]  %s2, 4096, %s212, [#allocation7], 256, 256, 16
        $region20: #{tpu_custom_call.1} parent=11 // pred_fallthru
          _
        // Predicated region
        $region21: #{tpu_custom_call.1} parent=11 // pred_check
          %p218 = pneg %p111
        $region22: #{tpu_custom_call.1} parent=11 // pred_check_branch
          %220 = sbr.rel (%p218) target = $region24
        $region23: #{tpu_custom_call.1} parent=11 // pred_region
          %s222 = ssub.s32 4096, 4096
          %223 = vsyncadd [#allocation10], %s222
          %s224 = sshll.u32 [#allocation9], 4
          %s225 = int_to_ptr.vmem [resolvable:$true] %s224
          %230 = dma.hbm_to_vmem [thread:$0]  %s3, 4096, %s225, [#allocation10], 256, 256, 16
        $region24: #{tpu_custom_call.1} parent=11 // pred_fallthru
          _
        // Predicated region
        $region25: #{tpu_custom_call.1} parent=11 // pred_check
          %p231 = pneg %p132
        $region26: #{tpu_custom_call.1} parent=11 // pred_check_branch
          %233 = sbr.rel (%p231) target = $region28
        $region27: #{tpu_custom_call.1} parent=11 // pred_region
          _
        $region28: #{tpu_custom_call.1} parent=11 // pred_fallthru
          _
      $region12: #{tpu_custom_call.1} parent=5 // pred_fallthru
        _
      %p234 = scmp.lt.s32.totalorder %s22, 2
      // Predicated region
      $region29: #{tpu_custom_call.1} parent=5 // pred_check
        %p235 = pneg %p234
      $region30: #{tpu_custom_call.1} parent=5 // pred_check_branch
        %237 = sbr.rel (%p235) target = $region32
      $region31: #{tpu_custom_call.1} parent=5 // pred_region
        // Predicated region
        $region33: #{tpu_custom_call.1} parent=31 // pred_check
          %p238 = pneg %p42
        $region34: #{tpu_custom_call.1} parent=31 // pred_check_branch
          %240 = sbr.rel (%p238) target = $region36
        $region35: #{tpu_custom_call.1} parent=31 // pred_region
          %s241 = sand.u32 %s32, 1
          %s242 = scalar_lea.sflag [#allocation4], %s241
          %s243 = sand.u32 %s32, 1
          %s244 = smul.addr %s243, 64
          %s245 = scalar_lea.vmem [#allocation3], %s244
          %s246 = smul.u32 8, %s22
          %s248 = ssub.s32 1024, 1024
          %249 = vsyncadd %s242, %s248
          %s250 = smul.addr %s246, 128
          %s251 = scalar_lea.hbm %s0, %s250
          %s252 = sshll.u32 %s245, 4
          %s253 = int_to_ptr.vmem [resolvable:$true] %s252
          %258 = dma.hbm_to_vmem [thread:$0]  %s251, 1024, %s253, %s242, 128, 128, 8
        $region36: #{tpu_custom_call.1} parent=31 // pred_fallthru
          _
      $region32: #{tpu_custom_call.1} parent=5 // pred_fallthru
        _
      %p259 = scmp.le.s32.totalorder 1, %s22
      %p260 = scmp.lt.s32.totalorder %s22, 3
      %p261 = pnand %p259, %p260
      %p262 = pneg %p261
      // Predicated region
      $region37: #{tpu_custom_call.1} parent=5 // pred_check
        _
      $region38: #{tpu_custom_call.1} parent=5 // pred_check_branch
        %264 = sbr.rel (%p261) target = $region40
      $region39: #{tpu_custom_call.1} parent=5 // pred_region
        %s265 = ssub.s32 %s22, 1
        %s266 = sand.u32 %s35, 1
        %s267 = scalar_lea.sflag [#allocation4], %s266
        %s268 = sand.u32 %s35, 1
        %s269 = smul.addr %s268, 64
        %s270 = scalar_lea.vmem [#allocation3], %s269
        // Predicated region
        $region41: #{tpu_custom_call.1} parent=39 // pred_check
          %p271 = pneg %p48
        $region42: #{tpu_custom_call.1} parent=39 // pred_check_branch
          %273 = sbr.rel (%p271) target = $region44
        $region43: #{tpu_custom_call.1} parent=39 // pred_region
          %274 = dma.done %s267, 1024
        $region44: #{tpu_custom_call.1} parent=39 // pred_fallthru
          _
        // Predicated region
        $region45: #{tpu_custom_call.1} parent=39 // pred_check
          %p275 = pneg %p69
        $region46: #{tpu_custom_call.1} parent=39 // pred_check_branch
          %277 = sbr.rel (%p275) target = $region48
        $region47: #{tpu_custom_call.1} parent=39 // pred_region
          %278 = dma.done [#allocation7], 128
        $region48: #{tpu_custom_call.1} parent=39 // pred_fallthru
          _
        // Predicated region
        $region49: #{tpu_custom_call.1} parent=39 // pred_check
          %p279 = pneg %p90
        $region50: #{tpu_custom_call.1} parent=39 // pred_check_branch
          %281 = sbr.rel (%p279) target = $region52
        $region51: #{tpu_custom_call.1} parent=39 // pred_region
          %282 = dma.done [#allocation7], 4096
        $region52: #{tpu_custom_call.1} parent=39 // pred_fallthru
          _
        // Predicated region
        $region53: #{tpu_custom_call.1} parent=39 // pred_check
          %p283 = pneg %p111
        $region54: #{tpu_custom_call.1} parent=39 // pred_check_branch
          %285 = sbr.rel (%p283) target = $region56
        $region55: #{tpu_custom_call.1} parent=39 // pred_region
          %286 = dma.done [#allocation10], 4096
        $region56: #{tpu_custom_call.1} parent=39 // pred_fallthru
          _
        %s287 = sand.u32 %s35, 1
        %s288 = scalar_lea.sflag [#allocation4], %s287
        %s289 = sand.u32 %s35, 1
        %s290 = smul.addr %s289, 64
        %s291 = scalar_lea.vmem [#allocation3], %s290
        %p292 = pneg %p48
        %p293 = pneg %p45
        %p294 = pneg %p69
        %p295 = pneg %p66
        %p296 = pneg %p90
        %p297 = pneg %p87
        %p298 = pneg %p111
        %p299 = pneg %p108
        %p300 = pneg %p132
        %p301 = pneg %p129
        %p302 = pneg %p158
        %p303 = pneg %p155
        %s304 = sand.u32 %s145, 1
        %s305 = scalar_lea.sflag [#allocation5], %s304
        %s306 = sand.u32 %s145, 1
        %s307 = smul.addr %s306, 64
        %s308 = scalar_lea.vmem [#allocation11], %s307
        %p309 = pneg %p179
        %p310 = pneg %p176
        %s311 = smul.u32 8, %s27
        %s312 = smul.u32 8, %s27
        %p313 = scmp.eq.s32.totalorder %s27, 0
        // Predicated region
        $region57: #{tpu_custom_call.1} parent=39 // pred_check
          %p314 = pneg %p313
        $region58: #{tpu_custom_call.1} parent=39 // pred_check_branch
          %316 = sbr.rel (%p314) target = $region60
        $region59: #{tpu_custom_call.1} parent=39 // pred_region
          %v317 = vld [vmem:[#allocation6] sm:$0xff]
          %318 = vst [vmem:[#allocation12] sm:$0xff] %v317
        $region60: #{tpu_custom_call.1} parent=39 // pred_fallthru
          _
        %v319 = vld [vmem:[%s270] sm:$0xff]
        %v320 = vld [vmem:[%s270 + $0x8] sm:$0xff]
        %v321 = vld [vmem:[%s270 + $0x10] sm:$0xff]
        %v322 = vld [vmem:[%s270 + $0x18] sm:$0xff]
        %v323 = vld [vmem:[%s270 + $0x20] sm:$0xff]
        %v324 = vld [vmem:[%s270 + $0x28] sm:$0xff]
        %v325 = vld [vmem:[%s270 + $0x30] sm:$0xff]
        %v326 = vld [vmem:[%s270 + $0x38] sm:$0xff]
        %v327 = vld [vmem:[#allocation8] sm:$0xff]
        %v328 = vld [vmem:[#allocation8 + $0x8] sm:$0xff]
        %v329 = vld [vmem:[#allocation8 + $0x10] sm:$0xff]
        %v330 = vld [vmem:[#allocation8 + $0x18] sm:$0xff]
        %v331 = vld [vmem:[#allocation8 + $0x20] sm:$0xff]
        %v332 = vld [vmem:[#allocation8 + $0x28] sm:$0xff]
        %v333 = vld [vmem:[#allocation8 + $0x30] sm:$0xff]
        %v334 = vld [vmem:[#allocation8 + $0x38] sm:$0xff]
        %v335 = vld [vmem:[#allocation8 + $0x40] sm:$0xff]
        %v336 = vld [vmem:[#allocation8 + $0x48] sm:$0xff]
        %v337 = vld [vmem:[#allocation8 + $0x50] sm:$0xff]
        %v338 = vld [vmem:[#allocation8 + $0x58] sm:$0xff]
        %v339 = vld [vmem:[#allocation8 + $0x60] sm:$0xff]
        %v340 = vld [vmem:[#allocation8 + $0x68] sm:$0xff]
        %v341 = vld [vmem:[#allocation8 + $0x70] sm:$0xff]
        %v342 = vld [vmem:[#allocation8 + $0x78] sm:$0xff]
        %v343 = vld [vmem:[#allocation8 + $0x80] sm:$0xff]
        %v344 = vld [vmem:[#allocation8 + $0x88] sm:$0xff]
        %v345 = vld [vmem:[#allocation8 + $0x90] sm:$0xff]
        %v346 = vld [vmem:[#allocation8 + $0x98] sm:$0xff]
        %v347 = vld [vmem:[#allocation8 + $0xa0] sm:$0xff]
        %v348 = vld [vmem:[#allocation8 + $0xa8] sm:$0xff]
        %v349 = vld [vmem:[#allocation8 + $0xb0] sm:$0xff]
        %v350 = vld [vmem:[#allocation8 + $0xb8] sm:$0xff]
        %v351 = vld [vmem:[#allocation8 + $0xc0] sm:$0xff]
        %v352 = vld [vmem:[#allocation8 + $0xc8] sm:$0xff]
        %v353 = vld [vmem:[#allocation8 + $0xd0] sm:$0xff]
        %v354 = vld [vmem:[#allocation8 + $0xd8] sm:$0xff]
        %v355 = vld [vmem:[#allocation8 + $0xe0] sm:$0xff]
        %v356 = vld [vmem:[#allocation8 + $0xe8] sm:$0xff]
        %v357 = vld [vmem:[#allocation8 + $0xf0] sm:$0xff]
        %v358 = vld [vmem:[#allocation8 + $0xf8] sm:$0xff]
        %v359 = vld [vmem:[%s4] sm:$0x3]
        %v361 = vlaneseq
        %v362 = vshrl.u32 %v361, 7
        %v363 = vsub.s32 0, %v362
        %v364 = vrot.slane %v359, %v363
        %v365 = vlaneseq
        %v366 = vshrl.u32 %v365, 7
        %v367 = vsub.s32 1, %v366
        %v368 = vrot.slane %v359, %v367
        %371 = vmatprep.subr.mxu0 %v358
        %372 = vmatpush1.msra.mxu0 %v357
        %373 = vmatprep.subr.mxu0 %v356
        %374 = vmatpush1.msra.mxu0 %v355
        %375 = vmatprep.subr.mxu0 %v354
        %376 = vmatpush1.msra.mxu0 %v353
        %377 = vmatprep.subr.mxu0 %v352
        %378 = vmatpush1.msra.mxu0 %v351
        %379 = vmatprep.subr.mxu0 %v350
        %380 = vmatpush1.msra.mxu0 %v349
        %381 = vmatprep.subr.mxu0 %v348
        %382 = vmatpush1.msra.mxu0 %v347
        %383 = vmatprep.subr.mxu0 %v346
        %384 = vmatpush1.msra.mxu0 %v345
        %385 = vmatprep.subr.mxu0 %v344
        %386 = vmatpush1.msra.mxu0 %v343
        %387 = vmatprep.subr.mxu0 %v342
        %388 = vmatpush1.msra.mxu0 %v341
        %389 = vmatprep.subr.mxu0 %v340
        %390 = vmatpush1.msra.mxu0 %v339
        %391 = vmatprep.subr.mxu0 %v338
        %392 = vmatpush1.msra.mxu0 %v337
        %393 = vmatprep.subr.mxu0 %v336
        %394 = vmatpush1.msra.mxu0 %v335
        %395 = vmatprep.subr.mxu0 %v334
        %396 = vmatpush1.msra.mxu0 %v333
        %397 = vmatprep.subr.mxu0 %v332
        %398 = vmatpush1.msra.mxu0 %v331
        %399 = vmatprep.subr.mxu0 %v330
        %400 = vmatpush1.msra.mxu0 %v329
        %401 = vmatprep.subr.mxu0 %v328
        %402 = vmatpush1.msra.mxu0 %v327
        %403 = vmatprep.subr.mxu0 0.0
        %404 = vmatpush2.msra.mxu0 0.0
        %405 = vmatprep.subr.mxu0 0.0
        %406 = vmatpush2.msra.mxu0 0.0
        %407 = vmatprep.subr.mxu0 0.0
        %408 = vmatpush2.msra.mxu0 0.0
        %409 = vmatprep.subr.mxu0 0.0
        %410 = vmatpush2.msra.mxu0 0.0
        %411 = vmatprep.subr.mxu0 0.0
        %412 = vmatpush2.msra.mxu0 0.0
        %413 = vmatprep.subr.mxu0 0.0
        %414 = vmatpush2.msra.mxu0 0.0
        %415 = vmatprep.subr.mxu0 0.0
        %416 = vmatpush2.msra.mxu0 0.0
        %417 = vmatprep.subr.mxu0 0.0
        %418 = vmatpush2.msra.mxu0 0.0
        %419 = vmatprep.subr.mxu0 0.0
        %420 = vmatpush2.msra.mxu0 0.0
        %421 = vmatprep.subr.mxu0 0.0
        %422 = vmatpush2.msra.mxu0 0.0
        %423 = vmatprep.subr.mxu0 0.0
        %424 = vmatpush2.msra.mxu0 0.0
        %425 = vmatprep.subr.mxu0 0.0
        %426 = vmatpush2.msra.mxu0 0.0
        %427 = vmatprep.subr.mxu0 0.0
        %428 = vmatpush2.msra.mxu0 0.0
        %429 = vmatprep.subr.mxu0 0.0
        %430 = vmatpush2.msra.mxu0 0.0
        %431 = vmatprep.subr.mxu0 0.0
        %432 = vmatpush2.msra.mxu0 0.0
        %433 = vmatprep.subr.mxu0 0.0
        %434 = vmatpush2.msra.mxu0 0.0
        %435 = vmatprep.mubr.f32.mxu0 0.0
        %436 = vmatmul.mubr.f32.gmra.mxu0 %v319
        %v437 = vpop.f32.mrf.mxu0
        %v438 = vadd.f32 %v364, %v437
        %v439 = vpop.f32.mrf.mxu0
        %v440 = vadd.f32 %v368, %v439
        %441 = vmatprep.mubr.f32.mxu0 0.0
        %442 = vmatmul.mubr.f32.gmra.mxu0 %v320
        %v443 = vpop.f32.mrf.mxu0
        %v444 = vadd.f32 %v364, %v443
        %v445 = vpop.f32.mrf.mxu0
        %v446 = vadd.f32 %v368, %v445
        %447 = vmatprep.mubr.f32.mxu0 0.0
        %448 = vmatmul.mubr.f32.gmra.mxu0 %v321
        %v449 = vpop.f32.mrf.mxu0
        %v450 = vadd.f32 %v364, %v449
        %v451 = vpop.f32.mrf.mxu0
        %v452 = vadd.f32 %v368, %v451
        %453 = vmatprep.mubr.f32.mxu0 0.0
        %454 = vmatmul.mubr.f32.gmra.mxu0 %v322
        %v455 = vpop.f32.mrf.mxu0
        %v456 = vadd.f32 %v364, %v455
        %v457 = vpop.f32.mrf.mxu0
        %v458 = vadd.f32 %v368, %v457
        %459 = vmatprep.mubr.f32.mxu0 0.0
        %460 = vmatmul.mubr.f32.gmra.mxu0 %v323
        %v461 = vpop.f32.mrf.mxu0
        %v462 = vadd.f32 %v364, %v461
        %v463 = vpop.f32.mrf.mxu0
        %v464 = vadd.f32 %v368, %v463
        %465 = vmatprep.mubr.f32.mxu0 0.0
        %466 = vmatmul.mubr.f32.gmra.mxu0 %v324
        %v467 = vpop.f32.mrf.mxu0
        %v468 = vadd.f32 %v364, %v467
        %v469 = vpop.f32.mrf.mxu0
        %v470 = vadd.f32 %v368, %v469
        %471 = vmatprep.mubr.f32.mxu0 0.0
        %472 = vmatmul.mubr.f32.gmra.mxu0 %v325
        %v473 = vpop.f32.mrf.mxu0
        %v474 = vadd.f32 %v364, %v473
        %v475 = vpop.f32.mrf.mxu0
        %v476 = vadd.f32 %v368, %v475
        %477 = vmatprep.mubr.f32.mxu0 0.0
        %478 = vmatmul.mubr.f32.gmra.mxu0 %v326
        %v479 = vpop.f32.mrf.mxu0
        %v480 = vadd.f32 %v364, %v479
        %v481 = vpop.f32.mrf.mxu0
        %v482 = vadd.f32 %v368, %v481
        %483 = vdwg.mxu0
        %484 = vst [vmem:[#allocation2] sm:$0xff] %v438
        %485 = vst [vmem:[#allocation2 + $0x8] sm:$0xff] %v440
        %486 = vst [vmem:[#allocation2 + $0x10] sm:$0xff] %v444
        %487 = vst [vmem:[#allocation2 + $0x18] sm:$0xff] %v446
        %488 = vst [vmem:[#allocation2 + $0x20] sm:$0xff] %v450
        %489 = vst [vmem:[#allocation2 + $0x28] sm:$0xff] %v452
        %490 = vst [vmem:[#allocation2 + $0x30] sm:$0xff] %v456
        %491 = vst [vmem:[#allocation2 + $0x38] sm:$0xff] %v458
        %492 = vst [vmem:[#allocation2 + $0x40] sm:$0xff] %v462
        %493 = vst [vmem:[#allocation2 + $0x48] sm:$0xff] %v464
        %494 = vst [vmem:[#allocation2 + $0x50] sm:$0xff] %v468
        %495 = vst [vmem:[#allocation2 + $0x58] sm:$0xff] %v470
        %496 = vst [vmem:[#allocation2 + $0x60] sm:$0xff] %v474
        %497 = vst [vmem:[#allocation2 + $0x68] sm:$0xff] %v476
        %498 = vst [vmem:[#allocation2 + $0x70] sm:$0xff] %v480
        %499 = vst [vmem:[#allocation2 + $0x78] sm:$0xff] %v482
        %v500 = vld [vmem:[#allocation12] sm:$0xff]
        %v501 = vld [vmem:[#allocation9] sm:$0xff]
        %v502 = vld [vmem:[#allocation9 + $0x8] sm:$0xff]
        %v503 = vld [vmem:[#allocation9 + $0x10] sm:$0xff]
        %v504 = vld [vmem:[#allocation9 + $0x18] sm:$0xff]
        %v505 = vld [vmem:[#allocation9 + $0x20] sm:$0xff]
        %v506 = vld [vmem:[#allocation9 + $0x28] sm:$0xff]
        %v507 = vld [vmem:[#allocation9 + $0x30] sm:$0xff]
        %v508 = vld [vmem:[#allocation9 + $0x38] sm:$0xff]
        %v509 = vld [vmem:[#allocation9 + $0x40] sm:$0xff]
        %v510 = vld [vmem:[#allocation9 + $0x48] sm:$0xff]
        %v511 = vld [vmem:[#allocation9 + $0x50] sm:$0xff]
        %v512 = vld [vmem:[#allocation9 + $0x58] sm:$0xff]
        %v513 = vld [vmem:[#allocation9 + $0x60] sm:$0xff]
        %v514 = vld [vmem:[#allocation9 + $0x68] sm:$0xff]
        %v515 = vld [vmem:[#allocation9 + $0x70] sm:$0xff]
        %v516 = vld [vmem:[#allocation9 + $0x78] sm:$0xff]
        %v517 = vld [vmem:[#allocation9 + $0x80] sm:$0xff]
        %v518 = vld [vmem:[#allocation9 + $0x88] sm:$0xff]
        %v519 = vld [vmem:[#allocation9 + $0x90] sm:$0xff]
        %v520 = vld [vmem:[#allocation9 + $0x98] sm:$0xff]
        %v521 = vld [vmem:[#allocation9 + $0xa0] sm:$0xff]
        %v522 = vld [vmem:[#allocation9 + $0xa8] sm:$0xff]
        %v523 = vld [vmem:[#allocation9 + $0xb0] sm:$0xff]
        %v524 = vld [vmem:[#allocation9 + $0xb8] sm:$0xff]
        %v525 = vld [vmem:[#allocation9 + $0xc0] sm:$0xff]
        %v526 = vld [vmem:[#allocation9 + $0xc8] sm:$0xff]
        %v527 = vld [vmem:[#allocation9 + $0xd0] sm:$0xff]
        %v528 = vld [vmem:[#allocation9 + $0xd8] sm:$0xff]
        %v529 = vld [vmem:[#allocation9 + $0xe0] sm:$0xff]
        %v530 = vld [vmem:[#allocation9 + $0xe8] sm:$0xff]
        %v531 = vld [vmem:[#allocation9 + $0xf0] sm:$0xff]
        %v532 = vld [vmem:[#allocation9 + $0xf8] sm:$0xff]
        %v533 = vld [vmem:[#allocation2] sm:$0xff]
        %v534 = vld [vmem:[#allocation2 + $0x8] sm:$0xff]
        %535 = vmatprep.subr.mxu0 %v532
        %536 = vmatpush1.msra.mxu0 %v531
        %537 = vmatprep.subr.mxu0 %v530
        %538 = vmatpush1.msra.mxu0 %v529
        %539 = vmatprep.subr.mxu0 %v528
        %540 = vmatpush1.msra.mxu0 %v527
        %541 = vmatprep.subr.mxu0 %v526
        %542 = vmatpush1.msra.mxu0 %v525
        %543 = vmatprep.subr.mxu0 %v524
        %544 = vmatpush1.msra.mxu0 %v523
        %545 = vmatprep.subr.mxu0 %v522
        %546 = vmatpush1.msra.mxu0 %v521
        %547 = vmatprep.subr.mxu0 %v520
        %548 = vmatpush1.msra.mxu0 %v519
        %549 = vmatprep.subr.mxu0 %v518
        %550 = vmatpush1.msra.mxu0 %v517
        %551 = vmatprep.subr.mxu0 %v516
        %552 = vmatpush1.msra.mxu0 %v515
        %553 = vmatprep.subr.mxu0 %v514
        %554 = vmatpush1.msra.mxu0 %v513
        %555 = vmatprep.subr.mxu0 %v512
        %556 = vmatpush1.msra.mxu0 %v511
        %557 = vmatprep.subr.mxu0 %v510
        %558 = vmatpush1.msra.mxu0 %v509
        %559 = vmatprep.subr.mxu0 %v508
        %560 = vmatpush1.msra.mxu0 %v507
        %561 = vmatprep.subr.mxu0 %v506
        %562 = vmatpush1.msra.mxu0 %v505
        %563 = vmatprep.subr.mxu0 %v504
        %564 = vmatpush1.msra.mxu0 %v503
        %565 = vmatprep.subr.mxu0 %v502
        %566 = vmatpush1.msra.mxu0 %v501
        %567 = vmatprep.subr.mxu0 0.0
        %568 = vmatpush2.msra.mxu0 0.0
        %569 = vmatprep.subr.mxu0 0.0
        %570 = vmatpush2.msra.mxu0 0.0
        %571 = vmatprep.subr.mxu0 0.0
        %572 = vmatpush2.msra.mxu0 0.0
        %573 = vmatprep.subr.mxu0 0.0
        %574 = vmatpush2.msra.mxu0 0.0
        %575 = vmatprep.subr.mxu0 0.0
        %576 = vmatpush2.msra.mxu0 0.0
        %577 = vmatprep.subr.mxu0 0.0
        %578 = vmatpush2.msra.mxu0 0.0
        %579 = vmatprep.subr.mxu0 0.0
        %580 = vmatpush2.msra.mxu0 0.0
        %581 = vmatprep.subr.mxu0 0.0
        %582 = vmatpush2.msra.mxu0 0.0
        %583 = vmatprep.subr.mxu0 0.0
        %584 = vmatpush2.msra.mxu0 0.0
        %585 = vmatprep.subr.mxu0 0.0
        %586 = vmatpush2.msra.mxu0 0.0
        %587 = vmatprep.subr.mxu0 0.0
        %588 = vmatpush2.msra.mxu0 0.0
        %589 = vmatprep.subr.mxu0 0.0
        %590 = vmatpush2.msra.mxu0 0.0
        %591 = vmatprep.subr.mxu0 0.0
        %592 = vmatpush2.msra.mxu0 0.0
        %593 = vmatprep.subr.mxu0 0.0
        %594 = vmatpush2.msra.mxu0 0.0
        %595 = vmatprep.subr.mxu0 0.0
        %596 = vmatpush2.msra.mxu0 0.0
        %597 = vmatprep.subr.mxu0 0.0
        %598 = vmatpush2.msra.mxu0 0.0
        %599 = vmatprep.mubr.f32.mxu0 0.0
        %600 = vmatmul.mubr.f32.gmra.mxu0 %v500
        %v601 = vpop.f32.mrf.mxu0
        %v602 = vadd.f32 %v533, %v601
        %v603 = vpop.f32.mrf.mxu0
        %v604 = vadd.f32 %v534, %v603
        %605 = vdwg.mxu0
        %606 = vmax.xlane.f32.xlu0 %v604
        %v607 = vpop.xlane.xlu0 %606
        %v608 = vsub.f32 %v604, %v607
        %v609 = vmul.f32 %v608, 1.442695
        %v610 = vpow.pop %v609
        %611 = vadd.xlane.f32.xlu0 %v610
        %v612 = vpop.xlane.xlu0 %611
        %v613 = vlog2.pop %v612
        %v614 = vmul.f32 %v613, 0.6931472
        %v615 = vsub.f32 %v608, %v614
        %616 = vst [vmem:[%s308] sm:$0xff] %v615
        %s617 = smul.u32 %s27, 8
        %p618 = scmp.lt.s32.totalorder %s617, 12
        %s619 = scalar_select %p618, 1, 0
        %v620 = vstv %s619
        %vm621 = vcmp.eq.s32.totalorder %v620, 1
        %v622 = vsel %vm621, %v602, %v500
        %v623 = vld [vmem:[#allocation9] sm:$0xff]
        %v624 = vld [vmem:[#allocation9 + $0x8] sm:$0xff]
        %v625 = vld [vmem:[#allocation9 + $0x10] sm:$0xff]
        %v626 = vld [vmem:[#allocation9 + $0x18] sm:$0xff]
        %v627 = vld [vmem:[#allocation9 + $0x20] sm:$0xff]
        %v628 = vld [vmem:[#allocation9 + $0x28] sm:$0xff]
        %v629 = vld [vmem:[#allocation9 + $0x30] sm:$0xff]
        %v630 = vld [vmem:[#allocation9 + $0x38] sm:$0xff]
        %v631 = vld [vmem:[#allocation9 + $0x40] sm:$0xff]
        %v632 = vld [vmem:[#allocation9 + $0x48] sm:$0xff]
        %v633 = vld [vmem:[#allocation9 + $0x50] sm:$0xff]
        %v634 = vld [vmem:[#allocation9 + $0x58] sm:$0xff]
        %v635 = vld [vmem:[#allocation9 + $0x60] sm:$0xff]
        %v636 = vld [vmem:[#allocation9 + $0x68] sm:$0xff]
        %v637 = vld [vmem:[#allocation9 + $0x70] sm:$0xff]
        %v638 = vld [vmem:[#allocation9 + $0x78] sm:$0xff]
        %v639 = vld [vmem:[#allocation9 + $0x80] sm:$0xff]
        %v640 = vld [vmem:[#allocation9 + $0x88] sm:$0xff]
        %v641 = vld [vmem:[#allocation9 + $0x90] sm:$0xff]
        %v642 = vld [vmem:[#allocation9 + $0x98] sm:$0xff]
        %v643 = vld [vmem:[#allocation9 + $0xa0] sm:$0xff]
        %v644 = vld [vmem:[#allocation9 + $0xa8] sm:$0xff]
        %v645 = vld [vmem:[#allocation9 + $0xb0] sm:$0xff]
        %v646 = vld [vmem:[#allocation9 + $0xb8] sm:$0xff]
        %v647 = vld [vmem:[#allocation9 + $0xc0] sm:$0xff]
        %v648 = vld [vmem:[#allocation9 + $0xc8] sm:$0xff]
        %v649 = vld [vmem:[#allocation9 + $0xd0] sm:$0xff]
        %v650 = vld [vmem:[#allocation9 + $0xd8] sm:$0xff]
        %v651 = vld [vmem:[#allocation9 + $0xe0] sm:$0xff]
        %v652 = vld [vmem:[#allocation9 + $0xe8] sm:$0xff]
        %v653 = vld [vmem:[#allocation9 + $0xf0] sm:$0xff]
        %v654 = vld [vmem:[#allocation9 + $0xf8] sm:$0xff]
        %s655 = scalar_lea.vmem [#allocation2], 16
        %v656 = vld [vmem:[%s655] sm:$0xff]
        %v657 = vld [vmem:[%s655 + $0x8] sm:$0xff]
        %658 = vmatprep.subr.mxu0 %v654
        %659 = vmatpush1.msra.mxu0 %v653
        %660 = vmatprep.subr.mxu0 %v652
        %661 = vmatpush1.msra.mxu0 %v651
        %662 = vmatprep.subr.mxu0 %v650
        %663 = vmatpush1.msra.mxu0 %v649
        %664 = vmatprep.subr.mxu0 %v648
        %665 = vmatpush1.msra.mxu0 %v647
        %666 = vmatprep.subr.mxu0 %v646
        %667 = vmatpush1.msra.mxu0 %v645
        %668 = vmatprep.subr.mxu0 %v644
        %669 = vmatpush1.msra.mxu0 %v643
        %670 = vmatprep.subr.mxu0 %v642
        %671 = vmatpush1.msra.mxu0 %v641
        %672 = vmatprep.subr.mxu0 %v640
        %673 = vmatpush1.msra.mxu0 %v639
        %674 = vmatprep.subr.mxu0 %v638
        %675 = vmatpush1.msra.mxu0 %v637
        %676 = vmatprep.subr.mxu0 %v636
        %677 = vmatpush1.msra.mxu0 %v635
        %678 = vmatprep.subr.mxu0 %v634
        %679 = vmatpush1.msra.mxu0 %v633
        %680 = vmatprep.subr.mxu0 %v632
        %681 = vmatpush1.msra.mxu0 %v631
        %682 = vmatprep.subr.mxu0 %v630
        %683 = vmatpush1.msra.mxu0 %v629
        %684 = vmatprep.subr.mxu0 %v628
        %685 = vmatpush1.msra.mxu0 %v627
        %686 = vmatprep.subr.mxu0 %v626
        %687 = vmatpush1.msra.mxu0 %v625
        %688 = vmatprep.subr.mxu0 %v624
        %689 = vmatpush1.msra.mxu0 %v623
        %690 = vmatprep.subr.mxu0 0.0
        %691 = vmatpush2.msra.mxu0 0.0
        %692 = vmatprep.subr.mxu0 0.0
        %693 = vmatpush2.msra.mxu0 0.0
        %694 = vmatprep.subr.mxu0 0.0
        %695 = vmatpush2.msra.mxu0 0.0
        %696 = vmatprep.subr.mxu0 0.0
        %697 = vmatpush2.msra.mxu0 0.0
        %698 = vmatprep.subr.mxu0 0.0
        %699 = vmatpush2.msra.mxu0 0.0
        %700 = vmatprep.subr.mxu0 0.0
        %701 = vmatpush2.msra.mxu0 0.0
        %702 = vmatprep.subr.mxu0 0.0
        %703 = vmatpush2.msra.mxu0 0.0
        %704 = vmatprep.subr.mxu0 0.0
        %705 = vmatpush2.msra.mxu0 0.0
        %706 = vmatprep.subr.mxu0 0.0
        %707 = vmatpush2.msra.mxu0 0.0
        %708 = vmatprep.subr.mxu0 0.0
        %709 = vmatpush2.msra.mxu0 0.0
        %710 = vmatprep.subr.mxu0 0.0
        %711 = vmatpush2.msra.mxu0 0.0
        %712 = vmatprep.subr.mxu0 0.0
        %713 = vmatpush2.msra.mxu0 0.0
        %714 = vmatprep.subr.mxu0 0.0
        %715 = vmatpush2.msra.mxu0 0.0
        %716 = vmatprep.subr.mxu0 0.0
        %717 = vmatpush2.msra.mxu0 0.0
        %718 = vmatprep.subr.mxu0 0.0
        %719 = vmatpush2.msra.mxu0 0.0
        %720 = vmatprep.subr.mxu0 0.0
        %721 = vmatpush2.msra.mxu0 0.0
        %722 = vmatprep.mubr.f32.mxu0 0.0
        %723 = vmatmul.mubr.f32.gmra.mxu0 %v622
        %v724 = vpop.f32.mrf.mxu0
        %v725 = vadd.f32 %v656, %v724
        %v726 = vpop.f32.mrf.mxu0
        %v727 = vadd.f32 %v657, %v726
        %728 = vdwg.mxu0
        %729 = vmax.xlane.f32.xlu0 %v727
        %v730 = vpop.xlane.xlu0 %729
        %v731 = vsub.f32 %v727, %v730
        %v732 = vmul.f32 %v731, 1.442695
        %v733 = vpow.pop %v732
        %734 = vadd.xlane.f32.xlu0 %v733
        %v735 = vpop.xlane.xlu0 %734
        %v736 = vlog2.pop %v735
        %v737 = vmul.f32 %v736, 0.6931472
        %v738 = vsub.f32 %v731, %v737
        %s739 = scalar_lea.vmem %s308, 8 [#allocation11]
        %740 = vst [vmem:[%s739] sm:$0xff] %v738
        %s741 = sadd.s32 %s617, 1
        %p742 = scmp.lt.s32.totalorder %s741, 12
        %s743 = scalar_select %p742, 1, 0
        %v744 = vstv %s743
        %vm745 = vcmp.eq.s32.totalorder %v744, 1
        %v746 = vsel %vm745, %v725, %v622
        %v747 = vld [vmem:[#allocation9] sm:$0xff]
        %v748 = vld [vmem:[#allocation9 + $0x8] sm:$0xff]
        %v749 = vld [vmem:[#allocation9 + $0x10] sm:$0xff]
        %v750 = vld [vmem:[#allocation9 + $0x18] sm:$0xff]
        %v751 = vld [vmem:[#allocation9 + $0x20] sm:$0xff]
        %v752 = vld [vmem:[#allocation9 + $0x28] sm:$0xff]
        %v753 = vld [vmem:[#allocation9 + $0x30] sm:$0xff]
        %v754 = vld [vmem:[#allocation9 + $0x38] sm:$0xff]
        %v755 = vld [vmem:[#allocation9 + $0x40] sm:$0xff]
        %v756 = vld [vmem:[#allocation9 + $0x48] sm:$0xff]
        %v757 = vld [vmem:[#allocation9 + $0x50] sm:$0xff]
        %v758 = vld [vmem:[#allocation9 + $0x58] sm:$0xff]
        %v759 = vld [vmem:[#allocation9 + $0x60] sm:$0xff]
        %v760 = vld [vmem:[#allocation9 + $0x68] sm:$0xff]
        %v761 = vld [vmem:[#allocation9 + $0x70] sm:$0xff]
        %v762 = vld [vmem:[#allocation9 + $0x78] sm:$0xff]
        %v763 = vld [vmem:[#allocation9 + $0x80] sm:$0xff]
        %v764 = vld [vmem:[#allocation9 + $0x88] sm:$0xff]
        %v765 = vld [vmem:[#allocation9 + $0x90] sm:$0xff]
        %v766 = vld [vmem:[#allocation9 + $0x98] sm:$0xff]
        %v767 = vld [vmem:[#allocation9 + $0xa0] sm:$0xff]
        %v768 = vld [vmem:[#allocation9 + $0xa8] sm:$0xff]
        %v769 = vld [vmem:[#allocation9 + $0xb0] sm:$0xff]
        %v770 = vld [vmem:[#allocation9 + $0xb8] sm:$0xff]
        %v771 = vld [vmem:[#allocation9 + $0xc0] sm:$0xff]
        %v772 = vld [vmem:[#allocation9 + $0xc8] sm:$0xff]
        %v773 = vld [vmem:[#allocation9 + $0xd0] sm:$0xff]
        %v774 = vld [vmem:[#allocation9 + $0xd8] sm:$0xff]
        %v775 = vld [vmem:[#allocation9 + $0xe0] sm:$0xff]
        %v776 = vld [vmem:[#allocation9 + $0xe8] sm:$0xff]
        %v777 = vld [vmem:[#allocation9 + $0xf0] sm:$0xff]
        %v778 = vld [vmem:[#allocation9 + $0xf8] sm:$0xff]
        %s779 = scalar_lea.vmem [#allocation2], 32
        %v780 = vld [vmem:[%s779] sm:$0xff]
        %v781 = vld [vmem:[%s779 + $0x8] sm:$0xff]
        %782 = vmatprep.subr.mxu0 %v778
        %783 = vmatpush1.msra.mxu0 %v777
        %784 = vmatprep.subr.mxu0 %v776
        %785 = vmatpush1.msra.mxu0 %v775
        %786 = vmatprep.subr.mxu0 %v774
        %787 = vmatpush1.msra.mxu0 %v773
        %788 = vmatprep.subr.mxu0 %v772
        %789 = vmatpush1.msra.mxu0 %v771
        %790 = vmatprep.subr.mxu0 %v770
        %791 = vmatpush1.msra.mxu0 %v769
        %792 = vmatprep.subr.mxu0 %v768
        %793 = vmatpush1.msra.mxu0 %v767
        %794 = vmatprep.subr.mxu0 %v766
        %795 = vmatpush1.msra.mxu0 %v765
        %796 = vmatprep.subr.mxu0 %v764
        %797 = vmatpush1.msra.mxu0 %v763
        %798 = vmatprep.subr.mxu0 %v762
        %799 = vmatpush1.msra.mxu0 %v761
        %800 = vmatprep.subr.mxu0 %v760
        %801 = vmatpush1.msra.mxu0 %v759
        %802 = vmatprep.subr.mxu0 %v758
        %803 = vmatpush1.msra.mxu0 %v757
        %804 = vmatprep.subr.mxu0 %v756
        %805 = vmatpush1.msra.mxu0 %v755
        %806 = vmatprep.subr.mxu0 %v754
        %807 = vmatpush1.msra.mxu0 %v753
        %808 = vmatprep.subr.mxu0 %v752
        %809 = vmatpush1.msra.mxu0 %v751
        %810 = vmatprep.subr.mxu0 %v750
        %811 = vmatpush1.msra.mxu0 %v749
        %812 = vmatprep.subr.mxu0 %v748
        %813 = vmatpush1.msra.mxu0 %v747
        %814 = vmatprep.subr.mxu0 0.0
        %815 = vmatpush2.msra.mxu0 0.0
        %816 = vmatprep.subr.mxu0 0.0
        %817 = vmatpush2.msra.mxu0 0.0
        %818 = vmatprep.subr.mxu0 0.0
        %819 = vmatpush2.msra.mxu0 0.0
        %820 = vmatprep.subr.mxu0 0.0
        %821 = vmatpush2.msra.mxu0 0.0
        %822 = vmatprep.subr.mxu0 0.0
        %823 = vmatpush2.msra.mxu0 0.0
        %824 = vmatprep.subr.mxu0 0.0
        %825 = vmatpush2.msra.mxu0 0.0
        %826 = vmatprep.subr.mxu0 0.0
        %827 = vmatpush2.msra.mxu0 0.0
        %828 = vmatprep.subr.mxu0 0.0
        %829 = vmatpush2.msra.mxu0 0.0
        %830 = vmatprep.subr.mxu0 0.0
        %831 = vmatpush2.msra.mxu0 0.0
        %832 = vmatprep.subr.mxu0 0.0
        %833 = vmatpush2.msra.mxu0 0.0
        %834 = vmatprep.subr.mxu0 0.0
        %835 = vmatpush2.msra.mxu0 0.0
        %836 = vmatprep.subr.mxu0 0.0
        %837 = vmatpush2.msra.mxu0 0.0
        %838 = vmatprep.subr.mxu0 0.0
        %839 = vmatpush2.msra.mxu0 0.0
        %840 = vmatprep.subr.mxu0 0.0
        %841 = vmatpush2.msra.mxu0 0.0
        %842 = vmatprep.subr.mxu0 0.0
        %843 = vmatpush2.msra.mxu0 0.0
        %844 = vmatprep.subr.mxu0 0.0
        %845 = vmatpush2.msra.mxu0 0.0
        %846 = vmatprep.mubr.f32.mxu0 0.0
        %847 = vmatmul.mubr.f32.gmra.mxu0 %v746
        %v848 = vpop.f32.mrf.mxu0
        %v849 = vadd.f32 %v780, %v848
        %v850 = vpop.f32.mrf.mxu0
        %v851 = vadd.f32 %v781, %v850
        %852 = vdwg.mxu0
        %853 = vmax.xlane.f32.xlu0 %v851
        %v854 = vpop.xlane.xlu0 %853
        %v855 = vsub.f32 %v851, %v854
        %v856 = vmul.f32 %v855, 1.442695
        %v857 = vpow.pop %v856
        %858 = vadd.xlane.f32.xlu0 %v857
        %v859 = vpop.xlane.xlu0 %858
        %v860 = vlog2.pop %v859
        %v861 = vmul.f32 %v860, 0.6931472
        %v862 = vsub.f32 %v855, %v861
        %s863 = scalar_lea.vmem %s308, 16 [#allocation11]
        %864 = vst [vmem:[%s863] sm:$0xff] %v862
        %s865 = sadd.s32 %s617, 2
        %p866 = scmp.lt.s32.totalorder %s865, 12
        %s867 = scalar_select %p866, 1, 0
        %v868 = vstv %s867
        %vm869 = vcmp.eq.s32.totalorder %v868, 1
        %v870 = vsel %vm869, %v849, %v746
        %v871 = vld [vmem:[#allocation9] sm:$0xff]
        %v872 = vld [vmem:[#allocation9 + $0x8] sm:$0xff]
        %v873 = vld [vmem:[#allocation9 + $0x10] sm:$0xff]
        %v874 = vld [vmem:[#allocation9 + $0x18] sm:$0xff]
        %v875 = vld [vmem:[#allocation9 + $0x20] sm:$0xff]
        %v876 = vld [vmem:[#allocation9 + $0x28] sm:$0xff]
        %v877 = vld [vmem:[#allocation9 + $0x30] sm:$0xff]
        %v878 = vld [vmem:[#allocation9 + $0x38] sm:$0xff]
        %v879 = vld [vmem:[#allocation9 + $0x40] sm:$0xff]
        %v880 = vld [vmem:[#allocation9 + $0x48] sm:$0xff]
        %v881 = vld [vmem:[#allocation9 + $0x50] sm:$0xff]
        %v882 = vld [vmem:[#allocation9 + $0x58] sm:$0xff]
        %v883 = vld [vmem:[#allocation9 + $0x60] sm:$0xff]
        %v884 = vld [vmem:[#allocation9 + $0x68] sm:$0xff]
        %v885 = vld [vmem:[#allocation9 + $0x70] sm:$0xff]
        %v886 = vld [vmem:[#allocation9 + $0x78] sm:$0xff]
        %v887 = vld [vmem:[#allocation9 + $0x80] sm:$0xff]
        %v888 = vld [vmem:[#allocation9 + $0x88] sm:$0xff]
        %v889 = vld [vmem:[#allocation9 + $0x90] sm:$0xff]
        %v890 = vld [vmem:[#allocation9 + $0x98] sm:$0xff]
        %v891 = vld [vmem:[#allocation9 + $0xa0] sm:$0xff]
        %v892 = vld [vmem:[#allocation9 + $0xa8] sm:$0xff]
        %v893 = vld [vmem:[#allocation9 + $0xb0] sm:$0xff]
        %v894 = vld [vmem:[#allocation9 + $0xb8] sm:$0xff]
        %v895 = vld [vmem:[#allocation9 + $0xc0] sm:$0xff]
        %v896 = vld [vmem:[#allocation9 + $0xc8] sm:$0xff]
        %v897 = vld [vmem:[#allocation9 + $0xd0] sm:$0xff]
        %v898 = vld [vmem:[#allocation9 + $0xd8] sm:$0xff]
        %v899 = vld [vmem:[#allocation9 + $0xe0] sm:$0xff]
        %v900 = vld [vmem:[#allocation9 + $0xe8] sm:$0xff]
        %v901 = vld [vmem:[#allocation9 + $0xf0] sm:$0xff]
        %v902 = vld [vmem:[#allocation9 + $0xf8] sm:$0xff]
        %s903 = scalar_lea.vmem [#allocation2], 48
        %v904 = vld [vmem:[%s903] sm:$0xff]
        %v905 = vld [vmem:[%s903 + $0x8] sm:$0xff]
        %906 = vmatprep.subr.mxu0 %v902
        %907 = vmatpush1.msra.mxu0 %v901
        %908 = vmatprep.subr.mxu0 %v900
        %909 = vmatpush1.msra.mxu0 %v899
        %910 = vmatprep.subr.mxu0 %v898
        %911 = vmatpush1.msra.mxu0 %v897
        %912 = vmatprep.subr.mxu0 %v896
        %913 = vmatpush1.msra.mxu0 %v895
        %914 = vmatprep.subr.mxu0 %v894
        %915 = vmatpush1.msra.mxu0 %v893
        %916 = vmatprep.subr.mxu0 %v892
        %917 = vmatpush1.msra.mxu0 %v891
        %918 = vmatprep.subr.mxu0 %v890
        %919 = vmatpush1.msra.mxu0 %v889
        %920 = vmatprep.subr.mxu0 %v888
        %921 = vmatpush1.msra.mxu0 %v887
        %922 = vmatprep.subr.mxu0 %v886
        %923 = vmatpush1.msra.mxu0 %v885
        %924 = vmatprep.subr.mxu0 %v884
        %925 = vmatpush1.msra.mxu0 %v883
        %926 = vmatprep.subr.mxu0 %v882
        %927 = vmatpush1.msra.mxu0 %v881
        %928 = vmatprep.subr.mxu0 %v880
        %929 = vmatpush1.msra.mxu0 %v879
        %930 = vmatprep.subr.mxu0 %v878
        %931 = vmatpush1.msra.mxu0 %v877
        %932 = vmatprep.subr.mxu0 %v876
        %933 = vmatpush1.msra.mxu0 %v875
        %934 = vmatprep.subr.mxu0 %v874
        %935 = vmatpush1.msra.mxu0 %v873
        %936 = vmatprep.subr.mxu0 %v872
        %937 = vmatpush1.msra.mxu0 %v871
        %938 = vmatprep.subr.mxu0 0.0
        %939 = vmatpush2.msra.mxu0 0.0
        %940 = vmatprep.subr.mxu0 0.0
        %941 = vmatpush2.msra.mxu0 0.0
        %942 = vmatprep.subr.mxu0 0.0
        %943 = vmatpush2.msra.mxu0 0.0
        %944 = vmatprep.subr.mxu0 0.0
        %945 = vmatpush2.msra.mxu0 0.0
        %946 = vmatprep.subr.mxu0 0.0
        %947 = vmatpush2.msra.mxu0 0.0
        %948 = vmatprep.subr.mxu0 0.0
        %949 = vmatpush2.msra.mxu0 0.0
        %950 = vmatprep.subr.mxu0 0.0
        %951 = vmatpush2.msra.mxu0 0.0
        %952 = vmatprep.subr.mxu0 0.0
        %953 = vmatpush2.msra.mxu0 0.0
        %954 = vmatprep.subr.mxu0 0.0
        %955 = vmatpush2.msra.mxu0 0.0
        %956 = vmatprep.subr.mxu0 0.0
        %957 = vmatpush2.msra.mxu0 0.0
        %958 = vmatprep.subr.mxu0 0.0
        %959 = vmatpush2.msra.mxu0 0.0
        %960 = vmatprep.subr.mxu0 0.0
        %961 = vmatpush2.msra.mxu0 0.0
        %962 = vmatprep.subr.mxu0 0.0
        %963 = vmatpush2.msra.mxu0 0.0
        %964 = vmatprep.subr.mxu0 0.0
        %965 = vmatpush2.msra.mxu0 0.0
        %966 = vmatprep.subr.mxu0 0.0
        %967 = vmatpush2.msra.mxu0 0.0
        %968 = vmatprep.subr.mxu0 0.0
        %969 = vmatpush2.msra.mxu0 0.0
        %970 = vmatprep.mubr.f32.mxu0 0.0
        %971 = vmatmul.mubr.f32.gmra.mxu0 %v870
        %v972 = vpop.f32.mrf.mxu0
        %v973 = vadd.f32 %v904, %v972
        %v974 = vpop.f32.mrf.mxu0
        %v975 = vadd.f32 %v905, %v974
        %976 = vdwg.mxu0
        %977 = vmax.xlane.f32.xlu0 %v975
        %v978 = vpop.xlane.xlu0 %977
        %v979 = vsub.f32 %v975, %v978
        %v980 = vmul.f32 %v979, 1.442695
        %v981 = vpow.pop %v980
        %982 = vadd.xlane.f32.xlu0 %v981
        %v983 = vpop.xlane.xlu0 %982
        %v984 = vlog2.pop %v983
        %v985 = vmul.f32 %v984, 0.6931472
        %v986 = vsub.f32 %v979, %v985
        %s987 = scalar_lea.vmem %s308, 24 [#allocation11]
        %988 = vst [vmem:[%s987] sm:$0xff] %v986
        %s989 = sadd.s32 %s617, 3
        %p990 = scmp.lt.s32.totalorder %s989, 12
        %s991 = scalar_select %p990, 1, 0
        %v992 = vstv %s991
        %vm993 = vcmp.eq.s32.totalorder %v992, 1
        %v994 = vsel %vm993, %v973, %v870
        %v995 = vld [vmem:[#allocation9] sm:$0xff]
        %v996 = vld [vmem:[#allocation9 + $0x8] sm:$0xff]
        %v997 = vld [vmem:[#allocation9 + $0x10] sm:$0xff]
        %v998 = vld [vmem:[#allocation9 + $0x18] sm:$0xff]
        %v999 = vld [vmem:[#allocation9 + $0x20] sm:$0xff]
        %v1000 = vld [vmem:[#allocation9 + $0x28] sm:$0xff]
        %v1001 = vld [vmem:[#allocation9 + $0x30] sm:$0xff]
        %v1002 = vld [vmem:[#allocation9 + $0x38] sm:$0xff]
        %v1003 = vld [vmem:[#allocation9 + $0x40] sm:$0xff]
        %v1004 = vld [vmem:[#allocation9 + $0x48] sm:$0xff]
        %v1005 = vld [vmem:[#allocation9 + $0x50] sm:$0xff]
        %v1006 = vld [vmem:[#allocation9 + $0x58] sm:$0xff]
        %v1007 = vld [vmem:[#allocation9 + $0x60] sm:$0xff]
        %v1008 = vld [vmem:[#allocation9 + $0x68] sm:$0xff]
        %v1009 = vld [vmem:[#allocation9 + $0x70] sm:$0xff]
        %v1010 = vld [vmem:[#allocation9 + $0x78] sm:$0xff]
        %v1011 = vld [vmem:[#allocation9 + $0x80] sm:$0xff]
        %v1012 = vld [vmem:[#allocation9 + $0x88] sm:$0xff]
        %v1013 = vld [vmem:[#allocation9 + $0x90] sm:$0xff]
        %v1014 = vld [vmem:[#allocation9 + $0x98] sm:$0xff]
        %v1015 = vld [vmem:[#allocation9 + $0xa0] sm:$0xff]
        %v1016 = vld [vmem:[#allocation9 + $0xa8] sm:$0xff]
        %v1017 = vld [vmem:[#allocation9 + $0xb0] sm:$0xff]
        %v1018 = vld [vmem:[#allocation9 + $0xb8] sm:$0xff]
        %v1019 = vld [vmem:[#allocation9 + $0xc0] sm:$0xff]
        %v1020 = vld [vmem:[#allocation9 + $0xc8] sm:$0xff]
        %v1021 = vld [vmem:[#allocation9 + $0xd0] sm:$0xff]
        %v1022 = vld [vmem:[#allocation9 + $0xd8] sm:$0xff]
        %v1023 = vld [vmem:[#allocation9 + $0xe0] sm:$0xff]
        %v1024 = vld [vmem:[#allocation9 + $0xe8] sm:$0xff]
        %v1025 = vld [vmem:[#allocation9 + $0xf0] sm:$0xff]
        %v1026 = vld [vmem:[#allocation9 + $0xf8] sm:$0xff]
        %s1027 = scalar_lea.vmem [#allocation2], 64
        %v1028 = vld [vmem:[%s1027] sm:$0xff]
        %v1029 = vld [vmem:[%s1027 + $0x8] sm:$0xff]
        %1030 = vmatprep.subr.mxu0 %v1026
        %1031 = vmatpush1.msra.mxu0 %v1025
        %1032 = vmatprep.subr.mxu0 %v1024
        %1033 = vmatpush1.msra.mxu0 %v1023
        %1034 = vmatprep.subr.mxu0 %v1022
        %1035 = vmatpush1.msra.mxu0 %v1021
        %1036 = vmatprep.subr.mxu0 %v1020
        %1037 = vmatpush1.msra.mxu0 %v1019
        %1038 = vmatprep.subr.mxu0 %v1018
        %1039 = vmatpush1.msra.mxu0 %v1017
        %1040 = vmatprep.subr.mxu0 %v1016
        %1041 = vmatpush1.msra.mxu0 %v1015
        %1042 = vmatprep.subr.mxu0 %v1014
        %1043 = vmatpush1.msra.mxu0 %v1013
        %1044 = vmatprep.subr.mxu0 %v1012
        %1045 = vmatpush1.msra.mxu0 %v1011
        %1046 = vmatprep.subr.mxu0 %v1010
        %1047 = vmatpush1.msra.mxu0 %v1009
        %1048 = vmatprep.subr.mxu0 %v1008
        %1049 = vmatpush1.msra.mxu0 %v1007
        %1050 = vmatprep.subr.mxu0 %v1006
        %1051 = vmatpush1.msra.mxu0 %v1005
        %1052 = vmatprep.subr.mxu0 %v1004
        %1053 = vmatpush1.msra.mxu0 %v1003
        %1054 = vmatprep.subr.mxu0 %v1002
        %1055 = vmatpush1.msra.mxu0 %v1001
        %1056 = vmatprep.subr.mxu0 %v1000
        %1057 = vmatpush1.msra.mxu0 %v999
        %1058 = vmatprep.subr.mxu0 %v998
        %1059 = vmatpush1.msra.mxu0 %v997
        %1060 = vmatprep.subr.mxu0 %v996
        %1061 = vmatpush1.msra.mxu0 %v995
        %1062 = vmatprep.subr.mxu0 0.0
        %1063 = vmatpush2.msra.mxu0 0.0
        %1064 = vmatprep.subr.mxu0 0.0
        %1065 = vmatpush2.msra.mxu0 0.0
        %1066 = vmatprep.subr.mxu0 0.0
        %1067 = vmatpush2.msra.mxu0 0.0
        %1068 = vmatprep.subr.mxu0 0.0
        %1069 = vmatpush2.msra.mxu0 0.0
        %1070 = vmatprep.subr.mxu0 0.0
        %1071 = vmatpush2.msra.mxu0 0.0
        %1072 = vmatprep.subr.mxu0 0.0
        %1073 = vmatpush2.msra.mxu0 0.0
        %1074 = vmatprep.subr.mxu0 0.0
        %1075 = vmatpush2.msra.mxu0 0.0
        %1076 = vmatprep.subr.mxu0 0.0
        %1077 = vmatpush2.msra.mxu0 0.0
        %1078 = vmatprep.subr.mxu0 0.0
        %1079 = vmatpush2.msra.mxu0 0.0
        %1080 = vmatprep.subr.mxu0 0.0
        %1081 = vmatpush2.msra.mxu0 0.0
        %1082 = vmatprep.subr.mxu0 0.0
        %1083 = vmatpush2.msra.mxu0 0.0
        %1084 = vmatprep.subr.mxu0 0.0
        %1085 = vmatpush2.msra.mxu0 0.0
        %1086 = vmatprep.subr.mxu0 0.0
        %1087 = vmatpush2.msra.mxu0 0.0
        %1088 = vmatprep.subr.mxu0 0.0
        %1089 = vmatpush2.msra.mxu0 0.0
        %1090 = vmatprep.subr.mxu0 0.0
        %1091 = vmatpush2.msra.mxu0 0.0
        %1092 = vmatprep.subr.mxu0 0.0
        %1093 = vmatpush2.msra.mxu0 0.0
        %1094 = vmatprep.mubr.f32.mxu0 0.0
        %1095 = vmatmul.mubr.f32.gmra.mxu0 %v994
        %v1096 = vpop.f32.mrf.mxu0
        %v1097 = vadd.f32 %v1028, %v1096
        %v1098 = vpop.f32.mrf.mxu0
        %v1099 = vadd.f32 %v1029, %v1098
        %1100 = vdwg.mxu0
        %1101 = vmax.xlane.f32.xlu0 %v1099
        %v1102 = vpop.xlane.xlu0 %1101
        %v1103 = vsub.f32 %v1099, %v1102
        %v1104 = vmul.f32 %v1103, 1.442695
        %v1105 = vpow.pop %v1104
        %1106 = vadd.xlane.f32.xlu0 %v1105
        %v1107 = vpop.xlane.xlu0 %1106
        %v1108 = vlog2.pop %v1107
        %v1109 = vmul.f32 %v1108, 0.6931472
        %v1110 = vsub.f32 %v1103, %v1109
        %s1111 = scalar_lea.vmem %s308, 32 [#allocation11]
        %1112 = vst [vmem:[%s1111] sm:$0xff] %v1110
        %s1113 = sadd.s32 %s617, 4
        %p1114 = scmp.lt.s32.totalorder %s1113, 12
        %s1115 = scalar_select %p1114, 1, 0
        %v1116 = vstv %s1115
        %vm1117 = vcmp.eq.s32.totalorder %v1116, 1
        %v1118 = vsel %vm1117, %v1097, %v994
        %v1119 = vld [vmem:[#allocation9] sm:$0xff]
        %v1120 = vld [vmem:[#allocation9 + $0x8] sm:$0xff]
        %v1121 = vld [vmem:[#allocation9 + $0x10] sm:$0xff]
        %v1122 = vld [vmem:[#allocation9 + $0x18] sm:$0xff]
        %v1123 = vld [vmem:[#allocation9 + $0x20] sm:$0xff]
        %v1124 = vld [vmem:[#allocation9 + $0x28] sm:$0xff]
        %v1125 = vld [vmem:[#allocation9 + $0x30] sm:$0xff]
        %v1126 = vld [vmem:[#allocation9 + $0x38] sm:$0xff]
        %v1127 = vld [vmem:[#allocation9 + $0x40] sm:$0xff]
        %v1128 = vld [vmem:[#allocation9 + $0x48] sm:$0xff]
        %v1129 = vld [vmem:[#allocation9 + $0x50] sm:$0xff]
        %v1130 = vld [vmem:[#allocation9 + $0x58] sm:$0xff]
        %v1131 = vld [vmem:[#allocation9 + $0x60] sm:$0xff]
        %v1132 = vld [vmem:[#allocation9 + $0x68] sm:$0xff]
        %v1133 = vld [vmem:[#allocation9 + $0x70] sm:$0xff]
        %v1134 = vld [vmem:[#allocation9 + $0x78] sm:$0xff]
        %v1135 = vld [vmem:[#allocation9 + $0x80] sm:$0xff]
        %v1136 = vld [vmem:[#allocation9 + $0x88] sm:$0xff]
        %v1137 = vld [vmem:[#allocation9 + $0x90] sm:$0xff]
        %v1138 = vld [vmem:[#allocation9 + $0x98] sm:$0xff]
        %v1139 = vld [vmem:[#allocation9 + $0xa0] sm:$0xff]
        %v1140 = vld [vmem:[#allocation9 + $0xa8] sm:$0xff]
        %v1141 = vld [vmem:[#allocation9 + $0xb0] sm:$0xff]
        %v1142 = vld [vmem:[#allocation9 + $0xb8] sm:$0xff]
        %v1143 = vld [vmem:[#allocation9 + $0xc0] sm:$0xff]
        %v1144 = vld [vmem:[#allocation9 + $0xc8] sm:$0xff]
        %v1145 = vld [vmem:[#allocation9 + $0xd0] sm:$0xff]
        %v1146 = vld [vmem:[#allocation9 + $0xd8] sm:$0xff]
        %v1147 = vld [vmem:[#allocation9 + $0xe0] sm:$0xff]
        %v1148 = vld [vmem:[#allocation9 + $0xe8] sm:$0xff]
        %v1149 = vld [vmem:[#allocation9 + $0xf0] sm:$0xff]
        %v1150 = vld [vmem:[#allocation9 + $0xf8] sm:$0xff]
        %s1151 = scalar_lea.vmem [#allocation2], 80
        %v1152 = vld [vmem:[%s1151] sm:$0xff]
        %v1153 = vld [vmem:[%s1151 + $0x8] sm:$0xff]
        %1154 = vmatprep.subr.mxu0 %v1150
        %1155 = vmatpush1.msra.mxu0 %v1149
        %1156 = vmatprep.subr.mxu0 %v1148
        %1157 = vmatpush1.msra.mxu0 %v1147
        %1158 = vmatprep.subr.mxu0 %v1146
        %1159 = vmatpush1.msra.mxu0 %v1145
        %1160 = vmatprep.subr.mxu0 %v1144
        %1161 = vmatpush1.msra.mxu0 %v1143
        %1162 = vmatprep.subr.mxu0 %v1142
        %1163 = vmatpush1.msra.mxu0 %v1141
        %1164 = vmatprep.subr.mxu0 %v1140
        %1165 = vmatpush1.msra.mxu0 %v1139
        %1166 = vmatprep.subr.mxu0 %v1138
        %1167 = vmatpush1.msra.mxu0 %v1137
        %1168 = vmatprep.subr.mxu0 %v1136
        %1169 = vmatpush1.msra.mxu0 %v1135
        %1170 = vmatprep.subr.mxu0 %v1134
        %1171 = vmatpush1.msra.mxu0 %v1133
        %1172 = vmatprep.subr.mxu0 %v1132
        %1173 = vmatpush1.msra.mxu0 %v1131
        %1174 = vmatprep.subr.mxu0 %v1130
        %1175 = vmatpush1.msra.mxu0 %v1129
        %1176 = vmatprep.subr.mxu0 %v1128
        %1177 = vmatpush1.msra.mxu0 %v1127
        %1178 = vmatprep.subr.mxu0 %v1126
        %1179 = vmatpush1.msra.mxu0 %v1125
        %1180 = vmatprep.subr.mxu0 %v1124
        %1181 = vmatpush1.msra.mxu0 %v1123
        %1182 = vmatprep.subr.mxu0 %v1122
        %1183 = vmatpush1.msra.mxu0 %v1121
        %1184 = vmatprep.subr.mxu0 %v1120
        %1185 = vmatpush1.msra.mxu0 %v1119
        %1186 = vmatprep.subr.mxu0 0.0
        %1187 = vmatpush2.msra.mxu0 0.0
        %1188 = vmatprep.subr.mxu0 0.0
        %1189 = vmatpush2.msra.mxu0 0.0
        %1190 = vmatprep.subr.mxu0 0.0
        %1191 = vmatpush2.msra.mxu0 0.0
        %1192 = vmatprep.subr.mxu0 0.0
        %1193 = vmatpush2.msra.mxu0 0.0
        %1194 = vmatprep.subr.mxu0 0.0
        %1195 = vmatpush2.msra.mxu0 0.0
        %1196 = vmatprep.subr.mxu0 0.0
        %1197 = vmatpush2.msra.mxu0 0.0
        %1198 = vmatprep.subr.mxu0 0.0
        %1199 = vmatpush2.msra.mxu0 0.0
        %1200 = vmatprep.subr.mxu0 0.0
        %1201 = vmatpush2.msra.mxu0 0.0
        %1202 = vmatprep.subr.mxu0 0.0
        %1203 = vmatpush2.msra.mxu0 0.0
        %1204 = vmatprep.subr.mxu0 0.0
        %1205 = vmatpush2.msra.mxu0 0.0
        %1206 = vmatprep.subr.mxu0 0.0
        %1207 = vmatpush2.msra.mxu0 0.0
        %1208 = vmatprep.subr.mxu0 0.0
        %1209 = vmatpush2.msra.mxu0 0.0
        %1210 = vmatprep.subr.mxu0 0.0
        %1211 = vmatpush2.msra.mxu0 0.0
        %1212 = vmatprep.subr.mxu0 0.0
        %1213 = vmatpush2.msra.mxu0 0.0
        %1214 = vmatprep.subr.mxu0 0.0
        %1215 = vmatpush2.msra.mxu0 0.0
        %1216 = vmatprep.subr.mxu0 0.0
        %1217 = vmatpush2.msra.mxu0 0.0
        %1218 = vmatprep.mubr.f32.mxu0 0.0
        %1219 = vmatmul.mubr.f32.gmra.mxu0 %v1118
        %v1220 = vpop.f32.mrf.mxu0
        %v1221 = vadd.f32 %v1152, %v1220
        %v1222 = vpop.f32.mrf.mxu0
        %v1223 = vadd.f32 %v1153, %v1222
        %1224 = vdwg.mxu0
        %1225 = vmax.xlane.f32.xlu0 %v1223
        %v1226 = vpop.xlane.xlu0 %1225
        %v1227 = vsub.f32 %v1223, %v1226
        %v1228 = vmul.f32 %v1227, 1.442695
        %v1229 = vpow.pop %v1228
        %1230 = vadd.xlane.f32.xlu0 %v1229
        %v1231 = vpop.xlane.xlu0 %1230
        %v1232 = vlog2.pop %v1231
        %v1233 = vmul.f32 %v1232, 0.6931472
        %v1234 = vsub.f32 %v1227, %v1233
        %s1235 = scalar_lea.vmem %s308, 40 [#allocation11]
        %1236 = vst [vmem:[%s1235] sm:$0xff] %v1234
        %s1237 = sadd.s32 %s617, 5
        %p1238 = scmp.lt.s32.totalorder %s1237, 12
        %s1239 = scalar_select %p1238, 1, 0
        %v1240 = vstv %s1239
        %vm1241 = vcmp.eq.s32.totalorder %v1240, 1
        %v1242 = vsel %vm1241, %v1221, %v1118
        %v1243 = vld [vmem:[#allocation9] sm:$0xff]
        %v1244 = vld [vmem:[#allocation9 + $0x8] sm:$0xff]
        %v1245 = vld [vmem:[#allocation9 + $0x10] sm:$0xff]
        %v1246 = vld [vmem:[#allocation9 + $0x18] sm:$0xff]
        %v1247 = vld [vmem:[#allocation9 + $0x20] sm:$0xff]
        %v1248 = vld [vmem:[#allocation9 + $0x28] sm:$0xff]
        %v1249 = vld [vmem:[#allocation9 + $0x30] sm:$0xff]
        %v1250 = vld [vmem:[#allocation9 + $0x38] sm:$0xff]
        %v1251 = vld [vmem:[#allocation9 + $0x40] sm:$0xff]
        %v1252 = vld [vmem:[#allocation9 + $0x48] sm:$0xff]
        %v1253 = vld [vmem:[#allocation9 + $0x50] sm:$0xff]
        %v1254 = vld [vmem:[#allocation9 + $0x58] sm:$0xff]
        %v1255 = vld [vmem:[#allocation9 + $0x60] sm:$0xff]
        %v1256 = vld [vmem:[#allocation9 + $0x68] sm:$0xff]
        %v1257 = vld [vmem:[#allocation9 + $0x70] sm:$0xff]
        %v1258 = vld [vmem:[#allocation9 + $0x78] sm:$0xff]
        %v1259 = vld [vmem:[#allocation9 + $0x80] sm:$0xff]
        %v1260 = vld [vmem:[#allocation9 + $0x88] sm:$0xff]
        %v1261 = vld [vmem:[#allocation9 + $0x90] sm:$0xff]
        %v1262 = vld [vmem:[#allocation9 + $0x98] sm:$0xff]
        %v1263 = vld [vmem:[#allocation9 + $0xa0] sm:$0xff]
        %v1264 = vld [vmem:[#allocation9 + $0xa8] sm:$0xff]
        %v1265 = vld [vmem:[#allocation9 + $0xb0] sm:$0xff]
        %v1266 = vld [vmem:[#allocation9 + $0xb8] sm:$0xff]
        %v1267 = vld [vmem:[#allocation9 + $0xc0] sm:$0xff]
        %v1268 = vld [vmem:[#allocation9 + $0xc8] sm:$0xff]
        %v1269 = vld [vmem:[#allocation9 + $0xd0] sm:$0xff]
        %v1270 = vld [vmem:[#allocation9 + $0xd8] sm:$0xff]
        %v1271 = vld [vmem:[#allocation9 + $0xe0] sm:$0xff]
        %v1272 = vld [vmem:[#allocation9 + $0xe8] sm:$0xff]
        %v1273 = vld [vmem:[#allocation9 + $0xf0] sm:$0xff]
        %v1274 = vld [vmem:[#allocation9 + $0xf8] sm:$0xff]
        %s1275 = scalar_lea.vmem [#allocation2], 96
        %v1276 = vld [vmem:[%s1275] sm:$0xff]
        %v1277 = vld [vmem:[%s1275 + $0x8] sm:$0xff]
        %1278 = vmatprep.subr.mxu0 %v1274
        %1279 = vmatpush1.msra.mxu0 %v1273
        %1280 = vmatprep.subr.mxu0 %v1272
        %1281 = vmatpush1.msra.mxu0 %v1271
        %1282 = vmatprep.subr.mxu0 %v1270
        %1283 = vmatpush1.msra.mxu0 %v1269
        %1284 = vmatprep.subr.mxu0 %v1268
        %1285 = vmatpush1.msra.mxu0 %v1267
        %1286 = vmatprep.subr.mxu0 %v1266
        %1287 = vmatpush1.msra.mxu0 %v1265
        %1288 = vmatprep.subr.mxu0 %v1264
        %1289 = vmatpush1.msra.mxu0 %v1263
        %1290 = vmatprep.subr.mxu0 %v1262
        %1291 = vmatpush1.msra.mxu0 %v1261
        %1292 = vmatprep.subr.mxu0 %v1260
        %1293 = vmatpush1.msra.mxu0 %v1259
        %1294 = vmatprep.subr.mxu0 %v1258
        %1295 = vmatpush1.msra.mxu0 %v1257
        %1296 = vmatprep.subr.mxu0 %v1256
        %1297 = vmatpush1.msra.mxu0 %v1255
        %1298 = vmatprep.subr.mxu0 %v1254
        %1299 = vmatpush1.msra.mxu0 %v1253
        %1300 = vmatprep.subr.mxu0 %v1252
        %1301 = vmatpush1.msra.mxu0 %v1251
        %1302 = vmatprep.subr.mxu0 %v1250
        %1303 = vmatpush1.msra.mxu0 %v1249
        %1304 = vmatprep.subr.mxu0 %v1248
        %1305 = vmatpush1.msra.mxu0 %v1247
        %1306 = vmatprep.subr.mxu0 %v1246
        %1307 = vmatpush1.msra.mxu0 %v1245
        %1308 = vmatprep.subr.mxu0 %v1244
        %1309 = vmatpush1.msra.mxu0 %v1243
        %1310 = vmatprep.subr.mxu0 0.0
        %1311 = vmatpush2.msra.mxu0 0.0
        %1312 = vmatprep.subr.mxu0 0.0
        %1313 = vmatpush2.msra.mxu0 0.0
        %1314 = vmatprep.subr.mxu0 0.0
        %1315 = vmatpush2.msra.mxu0 0.0
        %1316 = vmatprep.subr.mxu0 0.0
        %1317 = vmatpush2.msra.mxu0 0.0
        %1318 = vmatprep.subr.mxu0 0.0
        %1319 = vmatpush2.msra.mxu0 0.0
        %1320 = vmatprep.subr.mxu0 0.0
        %1321 = vmatpush2.msra.mxu0 0.0
        %1322 = vmatprep.subr.mxu0 0.0
        %1323 = vmatpush2.msra.mxu0 0.0
        %1324 = vmatprep.subr.mxu0 0.0
        %1325 = vmatpush2.msra.mxu0 0.0
        %1326 = vmatprep.subr.mxu0 0.0
        %1327 = vmatpush2.msra.mxu0 0.0
        %1328 = vmatprep.subr.mxu0 0.0
        %1329 = vmatpush2.msra.mxu0 0.0
        %1330 = vmatprep.subr.mxu0 0.0
        %1331 = vmatpush2.msra.mxu0 0.0
        %1332 = vmatprep.subr.mxu0 0.0
        %1333 = vmatpush2.msra.mxu0 0.0
        %1334 = vmatprep.subr.mxu0 0.0
        %1335 = vmatpush2.msra.mxu0 0.0
        %1336 = vmatprep.subr.mxu0 0.0
        %1337 = vmatpush2.msra.mxu0 0.0
        %1338 = vmatprep.subr.mxu0 0.0
        %1339 = vmatpush2.msra.mxu0 0.0
        %1340 = vmatprep.subr.mxu0 0.0
        %1341 = vmatpush2.msra.mxu0 0.0
        %1342 = vmatprep.mubr.f32.mxu0 0.0
        %1343 = vmatmul.mubr.f32.gmra.mxu0 %v1242
        %v1344 = vpop.f32.mrf.mxu0
        %v1345 = vadd.f32 %v1276, %v1344
        %v1346 = vpop.f32.mrf.mxu0
        %v1347 = vadd.f32 %v1277, %v1346
        %1348 = vdwg.mxu0
        %1349 = vmax.xlane.f32.xlu0 %v1347
        %v1350 = vpop.xlane.xlu0 %1349
        %v1351 = vsub.f32 %v1347, %v1350
        %v1352 = vmul.f32 %v1351, 1.442695
        %v1353 = vpow.pop %v1352
        %1354 = vadd.xlane.f32.xlu0 %v1353
        %v1355 = vpop.xlane.xlu0 %1354
        %v1356 = vlog2.pop %v1355
        %v1357 = vmul.f32 %v1356, 0.6931472
        %v1358 = vsub.f32 %v1351, %v1357
        %s1359 = scalar_lea.vmem %s308, 48 [#allocation11]
        %1360 = vst [vmem:[%s1359] sm:$0xff] %v1358
        %s1361 = sadd.s32 %s617, 6
        %p1362 = scmp.lt.s32.totalorder %s1361, 12
        %s1363 = scalar_select %p1362, 1, 0
        %v1364 = vstv %s1363
        %vm1365 = vcmp.eq.s32.totalorder %v1364, 1
        %v1366 = vsel %vm1365, %v1345, %v1242
        %v1367 = vld [vmem:[#allocation9] sm:$0xff]
        %v1368 = vld [vmem:[#allocation9 + $0x8] sm:$0xff]
        %v1369 = vld [vmem:[#allocation9 + $0x10] sm:$0xff]
        %v1370 = vld [vmem:[#allocation9 + $0x18] sm:$0xff]
        %v1371 = vld [vmem:[#allocation9 + $0x20] sm:$0xff]
        %v1372 = vld [vmem:[#allocation9 + $0x28] sm:$0xff]
        %v1373 = vld [vmem:[#allocation9 + $0x30] sm:$0xff]
        %v1374 = vld [vmem:[#allocation9 + $0x38] sm:$0xff]
        %v1375 = vld [vmem:[#allocation9 + $0x40] sm:$0xff]
        %v1376 = vld [vmem:[#allocation9 + $0x48] sm:$0xff]
        %v1377 = vld [vmem:[#allocation9 + $0x50] sm:$0xff]
        %v1378 = vld [vmem:[#allocation9 + $0x58] sm:$0xff]
        %v1379 = vld [vmem:[#allocation9 + $0x60] sm:$0xff]
        %v1380 = vld [vmem:[#allocation9 + $0x68] sm:$0xff]
        %v1381 = vld [vmem:[#allocation9 + $0x70] sm:$0xff]
        %v1382 = vld [vmem:[#allocation9 + $0x78] sm:$0xff]
        %v1383 = vld [vmem:[#allocation9 + $0x80] sm:$0xff]
        %v1384 = vld [vmem:[#allocation9 + $0x88] sm:$0xff]
        %v1385 = vld [vmem:[#allocation9 + $0x90] sm:$0xff]
        %v1386 = vld [vmem:[#allocation9 + $0x98] sm:$0xff]
        %v1387 = vld [vmem:[#allocation9 + $0xa0] sm:$0xff]
        %v1388 = vld [vmem:[#allocation9 + $0xa8] sm:$0xff]
        %v1389 = vld [vmem:[#allocation9 + $0xb0] sm:$0xff]
        %v1390 = vld [vmem:[#allocation9 + $0xb8] sm:$0xff]
        %v1391 = vld [vmem:[#allocation9 + $0xc0] sm:$0xff]
        %v1392 = vld [vmem:[#allocation9 + $0xc8] sm:$0xff]
        %v1393 = vld [vmem:[#allocation9 + $0xd0] sm:$0xff]
        %v1394 = vld [vmem:[#allocation9 + $0xd8] sm:$0xff]
        %v1395 = vld [vmem:[#allocation9 + $0xe0] sm:$0xff]
        %v1396 = vld [vmem:[#allocation9 + $0xe8] sm:$0xff]
        %v1397 = vld [vmem:[#allocation9 + $0xf0] sm:$0xff]
        %v1398 = vld [vmem:[#allocation9 + $0xf8] sm:$0xff]
        %s1399 = scalar_lea.vmem [#allocation2], 112
        %v1400 = vld [vmem:[%s1399] sm:$0xff]
        %v1401 = vld [vmem:[%s1399 + $0x8] sm:$0xff]
        %1402 = vmatprep.subr.mxu0 %v1398
        %1403 = vmatpush1.msra.mxu0 %v1397
        %1404 = vmatprep.subr.mxu0 %v1396
        %1405 = vmatpush1.msra.mxu0 %v1395
        %1406 = vmatprep.subr.mxu0 %v1394
        %1407 = vmatpush1.msra.mxu0 %v1393
        %1408 = vmatprep.subr.mxu0 %v1392
        %1409 = vmatpush1.msra.mxu0 %v1391
        %1410 = vmatprep.subr.mxu0 %v1390
        %1411 = vmatpush1.msra.mxu0 %v1389
        %1412 = vmatprep.subr.mxu0 %v1388
        %1413 = vmatpush1.msra.mxu0 %v1387
        %1414 = vmatprep.subr.mxu0 %v1386
        %1415 = vmatpush1.msra.mxu0 %v1385
        %1416 = vmatprep.subr.mxu0 %v1384
        %1417 = vmatpush1.msra.mxu0 %v1383
        %1418 = vmatprep.subr.mxu0 %v1382
        %1419 = vmatpush1.msra.mxu0 %v1381
        %1420 = vmatprep.subr.mxu0 %v1380
        %1421 = vmatpush1.msra.mxu0 %v1379
        %1422 = vmatprep.subr.mxu0 %v1378
        %1423 = vmatpush1.msra.mxu0 %v1377
        %1424 = vmatprep.subr.mxu0 %v1376
        %1425 = vmatpush1.msra.mxu0 %v1375
        %1426 = vmatprep.subr.mxu0 %v1374
        %1427 = vmatpush1.msra.mxu0 %v1373
        %1428 = vmatprep.subr.mxu0 %v1372
        %1429 = vmatpush1.msra.mxu0 %v1371
        %1430 = vmatprep.subr.mxu0 %v1370
        %1431 = vmatpush1.msra.mxu0 %v1369
        %1432 = vmatprep.subr.mxu0 %v1368
        %1433 = vmatpush1.msra.mxu0 %v1367
        %1434 = vmatprep.subr.mxu0 0.0
        %1435 = vmatpush2.msra.mxu0 0.0
        %1436 = vmatprep.subr.mxu0 0.0
        %1437 = vmatpush2.msra.mxu0 0.0
        %1438 = vmatprep.subr.mxu0 0.0
        %1439 = vmatpush2.msra.mxu0 0.0
        %1440 = vmatprep.subr.mxu0 0.0
        %1441 = vmatpush2.msra.mxu0 0.0
        %1442 = vmatprep.subr.mxu0 0.0
        %1443 = vmatpush2.msra.mxu0 0.0
        %1444 = vmatprep.subr.mxu0 0.0
        %1445 = vmatpush2.msra.mxu0 0.0
        %1446 = vmatprep.subr.mxu0 0.0
        %1447 = vmatpush2.msra.mxu0 0.0
        %1448 = vmatprep.subr.mxu0 0.0
        %1449 = vmatpush2.msra.mxu0 0.0
        %1450 = vmatprep.subr.mxu0 0.0
        %1451 = vmatpush2.msra.mxu0 0.0
        %1452 = vmatprep.subr.mxu0 0.0
        %1453 = vmatpush2.msra.mxu0 0.0
        %1454 = vmatprep.subr.mxu0 0.0
        %1455 = vmatpush2.msra.mxu0 0.0
        %1456 = vmatprep.subr.mxu0 0.0
        %1457 = vmatpush2.msra.mxu0 0.0
        %1458 = vmatprep.subr.mxu0 0.0
        %1459 = vmatpush2.msra.mxu0 0.0
        %1460 = vmatprep.subr.mxu0 0.0
        %1461 = vmatpush2.msra.mxu0 0.0
        %1462 = vmatprep.subr.mxu0 0.0
        %1463 = vmatpush2.msra.mxu0 0.0
        %1464 = vmatprep.subr.mxu0 0.0
        %1465 = vmatpush2.msra.mxu0 0.0
        %1466 = vmatprep.mubr.f32.mxu0 0.0
        %1467 = vmatmul.mubr.f32.gmra.mxu0 %v1366
        %v1468 = vpop.f32.mrf.mxu0
        %v1469 = vadd.f32 %v1400, %v1468
        %v1470 = vpop.f32.mrf.mxu0
        %v1471 = vadd.f32 %v1401, %v1470
        %1472 = vdwg.mxu0
        %1473 = vmax.xlane.f32.xlu0 %v1471
        %v1474 = vpop.xlane.xlu0 %1473
        %v1475 = vsub.f32 %v1471, %v1474
        %v1476 = vmul.f32 %v1475, 1.442695
        %v1477 = vpow.pop %v1476
        %1478 = vadd.xlane.f32.xlu0 %v1477
        %v1479 = vpop.xlane.xlu0 %1478
        %v1480 = vlog2.pop %v1479
        %v1481 = vmul.f32 %v1480, 0.6931472
        %v1482 = vsub.f32 %v1475, %v1481
        %s1483 = scalar_lea.vmem %s308, 56 [#allocation11]
        %1484 = vst [vmem:[%s1483] sm:$0xff] %v1482
        %s1485 = sadd.s32 %s617, 7
        %p1486 = scmp.lt.s32.totalorder %s1485, 12
        %s1487 = scalar_select %p1486, 1, 0
        %v1488 = vstv %s1487
        %vm1489 = vcmp.eq.s32.totalorder %v1488, 1
        %v1490 = vsel %vm1489, %v1469, %v1366
        %1491 = vst [vmem:[#allocation12] sm:$0xff] %v1490
        %s1492 = sand.u32 %s145, 1
        %s1493 = scalar_lea.sflag [#allocation5], %s1492
        %s1494 = sand.u32 %s145, 1
        %s1495 = smul.addr %s1494, 64
        %s1496 = scalar_lea.vmem [#allocation11], %s1495
        // Predicated region
        $region61: #{tpu_custom_call.1} parent=39 // pred_check
          %p1497 = pneg %p155
        $region62: #{tpu_custom_call.1} parent=39 // pred_check_branch
          %1499 = sbr.rel (%p1497) target = $region64
        $region63: #{tpu_custom_call.1} parent=39 // pred_region
          %s1500 = smul.u32 8, %s27
          %s1502 = ssub.s32 1024, 1024
          %1503 = vsyncadd %s1493, %s1502
          %s1504 = smul.addr %s1500, 128
          %s1505 = scalar_lea.hbm %s5, %s1504
          %s1506 = sshll.u32 %s1496, 4
          %s1507 = int_to_ptr.vmem [resolvable:$true] %s1506
          %1512 = dma.vmem_to_hbm [thread:$0]  %s1507, 1024, %s1505, %s1493, 128, 128, 8
        $region64: #{tpu_custom_call.1} parent=39 // pred_fallthru
          _
        // Predicated region
        $region65: #{tpu_custom_call.1} parent=39 // pred_check
          %p1513 = pneg %p176
        $region66: #{tpu_custom_call.1} parent=39 // pred_check_branch
          %1515 = sbr.rel (%p1513) target = $region68
        $region67: #{tpu_custom_call.1} parent=39 // pred_region
          %s1517 = ssub.s32 128, 128
          %1518 = vsyncadd [#allocation13], %s1517
          %s1520 = sshll.u32 [#allocation12], 4
          %s1521 = int_to_ptr.vmem [resolvable:$true] %s1520
          %1523 = dma.vmem_to_hbm [thread:$0]  %s1521, 128, %s6, [#allocation13]
        $region68: #{tpu_custom_call.1} parent=39 // pred_fallthru
          _
        // Predicated region
        $region69: #{tpu_custom_call.1} parent=39 // pred_check
          %p1524 = pneg %p176
        $region70: #{tpu_custom_call.1} parent=39 // pred_check_branch
          %1526 = sbr.rel (%p1524) target = $region72
        $region71: #{tpu_custom_call.1} parent=39 // pred_region
          %1527 = dma.done [#allocation13], 128
        $region72: #{tpu_custom_call.1} parent=39 // pred_fallthru
          _
      $region40: #{tpu_custom_call.1} parent=5 // pred_fallthru
        _
      %p1528 = scmp.le.s32.totalorder 2, %s22
      // Predicated region
      $region73: #{tpu_custom_call.1} parent=5 // pred_check
        %p1529 = pneg %p1528
      $region74: #{tpu_custom_call.1} parent=5 // pred_check_branch
        %1531 = sbr.rel (%p1529) target = $region76
      $region75: #{tpu_custom_call.1} parent=5 // pred_region
        %s1532 = ssub.s32 %s22, 2
        // Predicated region
        $region77: #{tpu_custom_call.1} parent=75 // pred_check
          %p1533 = pneg %p161
        $region78: #{tpu_custom_call.1} parent=75 // pred_check_branch
          %1535 = sbr.rel (%p1533) target = $region80
        $region79: #{tpu_custom_call.1} parent=75 // pred_region
          %s1536 = sand.u32 %s146, 1
          %s1537 = scalar_lea.sflag [#allocation5], %s1536
          %s1538 = sand.u32 %s146, 1
          %s1539 = smul.addr %s1538, 64
          %s1540 = scalar_lea.vmem [#allocation11], %s1539
          %1541 = dma.done %s1537, 1024
        $region80: #{tpu_custom_call.1} parent=75 // pred_fallthru
          _
      $region76: #{tpu_custom_call.1} parent=5 // pred_fallthru
        _
    $region6: #{tpu_custom_call.1} parent=1 // loop_footer
      %s26 = sadd.s32 1, %s22
    $region7: #{tpu_custom_call.1} parent=1 // loop_footer_branch
      %21 = sbr.rel target = $region3
    $region8: #{tpu_custom_call.1} parent=1 // loop_exit
      _
    %1542 = vsyncpa [#allocation4], 1
    %s1543 = scalar_lea.sflag [#allocation4], 1
    %1544 = vsyncpa %s1543, 1
    %1545 = vsyncpa [#allocation7], 1
    %1546 = vsyncpa [#allocation10], 1
    %1547 = vsyncpa [#allocation5], 1
    %s1548 = scalar_lea.sflag [#allocation5], 1
    %1549 = vsyncpa %s1548, 1
    %1550 = vsyncpa [#allocation13], 1

</llo_original>
